<compile_context>
chip_gen: v7x
topology: tpu7x:2x2x1
jax: 0.10.0
libtpu: 0.0.40
codegen_flags: <defaults>
</compile_context>

<pallas_src>
import functools

import jax
import jax.numpy as jnp
from jax.experimental import pallas as pl
from jax.experimental.pallas import tpu as pltpu


def _round_up(x, m):
    return ((x + m - 1) // m) * m


def _pick_tile(n, candidates):
    for c in candidates:
        if n % c == 0:
            return c
    return n  # n itself is a multiple of 128


# ---------------------------------------------------------------------------
# Kernel 1: one GCNConv layer
#   out = relu( (D^-1/2 (A+I) D^-1/2 @ X) @ W + b )         [optionally * d]
#   grid = (row_tiles, k_tiles); streamed operand is raw int8 (A+I); the
#   column half of the normalization is already folded into X, the row half
#   (d_row) is applied once per row tile in the finalize.
# ---------------------------------------------------------------------------
def gcn_conv_kernel(adj_ref, x_ref, w_ref, b_ref, drow_ref, out_ref, acc_ref,
                    *, tk, x_resident, scale_out):
    k = pl.program_id(1)

    @pl.when(k == 0)
    def _():
        acc_ref[...] = jnp.zeros_like(acc_ref)

    if x_resident:
        start = pl.multiple_of(k * tk, tk)
        xk = x_ref[pl.ds(start, tk), :]
    else:
        xk = x_ref[...]

    # raw (A+I) tile is small integers: VPU cast to bf16 is exact, MXU runs bf16.
    acc_ref[...] += jnp.dot(adj_ref[...].astype(jnp.bfloat16), xk,
                            preferred_element_type=jnp.float32)

    @pl.when(k == pl.num_programs(1) - 1)
    def _():
        pre = acc_ref[...] * drow_ref[...]              # row half of D^-1/2
        h = jnp.dot(pre.astype(jnp.bfloat16), w_ref[...],
                    preferred_element_type=jnp.float32)
        h = jnp.maximum(h + b_ref[...], 0.0)            # bias + ReLU in f32
        if scale_out:
            # pre-apply the NEXT layer's column normalization (d * h); this
            # also zeroes padded node rows (d == 0 there).
            h = h * drow_ref[...]
        out_ref[...] = h.astype(out_ref.dtype)


def _gcn_conv_layer(adj_i8, x_scaled, w_p, b_p, d_row, *, tm, tk,
                    x_resident, scale_out, out_dtype, vmem_limit):
    n_pad = adj_i8.shape[0]
    f_in = x_scaled.shape[1]
    h_out = w_p.shape[1]
    grid = (n_pad // tm, n_pad // tk)
    if x_resident:
        x_spec = pl.BlockSpec((n_pad, f_in), lambda i, k: (0, 0))   # VMEM-resident
    else:
        x_spec = pl.BlockSpec((tk, f_in), lambda i, k: (k, 0))      # streamed k-tiles
    kernel = functools.partial(gcn_conv_kernel, tk=tk,
                               x_resident=x_resident, scale_out=scale_out)
    return pl.pallas_call(
        kernel,
        out_shape=jax.ShapeDtypeStruct((n_pad, h_out), out_dtype),
        grid_spec=pltpu.PrefetchScalarGridSpec(
            num_scalar_prefetch=0,
            grid=grid,
            in_specs=[
                pl.BlockSpec((tm, tk), lambda i, k: (i, k)),        # raw A+I (int8)
                x_spec,                                             # features
                pl.BlockSpec((f_in, h_out), lambda i, k: (0, 0)),   # weight (resident)
                pl.BlockSpec((1, h_out), lambda i, k: (0, 0)),      # bias row
                pl.BlockSpec((tm, 1), lambda i, k: (i, 0)),         # d^-1/2 row slice
            ],
            out_specs=pl.BlockSpec((tm, h_out), lambda i, k: (i, 0)),
            scratch_shapes=[pltpu.VMEM((tm, f_in), jnp.float32)],
        ),
        compiler_params=pltpu.CompilerParams(
            dimension_semantics=("parallel", "arbitrary"),
            vmem_limit_bytes=vmem_limit),
    )(adj_i8, x_scaled, w_p, b_p, d_row)


# ---------------------------------------------------------------------------
# Kernel 2: conv layer 2 FUSED with global_mean_pool + output Linear.
#   h2 is never written to HBM; a (Gp, H) f32 scratch accumulates pool @ h2
#   over row tiles, and the output FC runs at the last grid point.
# ---------------------------------------------------------------------------
def gcn_conv_pool_fc_kernel(adj_ref, x_ref, w_ref, b_ref, drow_ref, pool_ref,
                            wo_ref, bo_ref, out_ref, acc_ref, pool_acc_ref,
                            *, tk, x_resident):
    i = pl.program_id(0)
    k = pl.program_id(1)
    last_i = pl.num_programs(0) - 1
    last_k = pl.num_programs(1) - 1

    @pl.when(jnp.logical_and(i == 0, k == 0))
    def _():
        pool_acc_ref[...] = jnp.zeros_like(pool_acc_ref)

    @pl.when(k == 0)
    def _():
        acc_ref[...] = jnp.zeros_like(acc_ref)

    if x_resident:
        start = pl.multiple_of(k * tk, tk)
        xk = x_ref[pl.ds(start, tk), :]
    else:
        xk = x_ref[...]

    acc_ref[...] += jnp.dot(adj_ref[...].astype(jnp.bfloat16), xk,
                            preferred_element_type=jnp.float32)

    @pl.when(k == last_k)
    def _():
        pre = acc_ref[...] * drow_ref[...]
        h = jnp.dot(pre.astype(jnp.bfloat16), w_ref[...],
                    preferred_element_type=jnp.float32)
        h = jnp.maximum(h + b_ref[...], 0.0)
        # global_mean_pool partial sum: (Gp, TM) @ (TM, H) in f32.
        # Padded node rows of h are non-zero (relu(bias)) but the pool
        # matrix's padded columns are zero, so they never contribute.
        pool_acc_ref[...] += jnp.dot(pool_ref[...], h,
                                     preferred_element_type=jnp.float32)

    @pl.when(jnp.logical_and(i == last_i, k == last_k))
    def _():
        out_ref[...] = (jnp.dot(pool_acc_ref[...], wo_ref[...],
                                preferred_element_type=jnp.float32)
                        + bo_ref[...]).astype(out_ref.dtype)


def _gcn_conv_pool_fc(adj_i8, x_scaled, w_p, b_p, d_row, pool_p, wo_p, bo_p,
                      *, tm, tk, x_resident, vmem_limit):
    n_pad = adj_i8.shape[0]
    f_in = x_scaled.shape[1]
    h_out = w_p.shape[1]
    g_pad = pool_p.shape[0]
    o_dim = wo_p.shape[1]
    grid = (n_pad // tm, n_pad // tk)
    if x_resident:
        x_spec = pl.BlockSpec((n_pad, f_in), lambda i, k: (0, 0))
    else:
        x_spec = pl.BlockSpec((tk, f_in), lambda i, k: (k, 0))
    kernel = functools.partial(gcn_conv_pool_fc_kernel, tk=tk,
                               x_resident=x_resident)
    return pl.pallas_call(
        kernel,
        out_shape=jax.ShapeDtypeStruct((g_pad, o_dim), jnp.float32),
        grid_spec=pltpu.PrefetchScalarGridSpec(
            num_scalar_prefetch=0,
            grid=grid,
            in_specs=[
                pl.BlockSpec((tm, tk), lambda i, k: (i, k)),        # raw A+I (int8)
                x_spec,                                             # layer-1 output
                pl.BlockSpec((f_in, h_out), lambda i, k: (0, 0)),   # W2
                pl.BlockSpec((1, h_out), lambda i, k: (0, 0)),      # b2
                pl.BlockSpec((tm, 1), lambda i, k: (i, 0)),         # d^-1/2 row slice
                pl.BlockSpec((g_pad, tm), lambda i, k: (0, i)),     # pool column tile
                pl.BlockSpec((h_out, o_dim), lambda i, k: (0, 0)),  # Wo
                pl.BlockSpec((1, o_dim), lambda i, k: (0, 0)),      # bo
            ],
            out_specs=pl.BlockSpec((g_pad, o_dim), lambda i, k: (0, 0)),
            scratch_shapes=[pltpu.VMEM((tm, f_in), jnp.float32),
                            pltpu.VMEM((g_pad, h_out), jnp.float32)],
        ),
        compiler_params=pltpu.CompilerParams(
            # row axis carries pool_acc state -> must be "arbitrary" too.
            dimension_semantics=("arbitrary", "arbitrary"),
            vmem_limit_bytes=vmem_limit),
    )(adj_i8, x_scaled, w_p, b_p, d_row, pool_p, wo_p, bo_p)


# ---------------------------------------------------------------------------
# Wrapper: GCNModel(input_dim, output_dim, hidden_dims=[H1, H2], act='relu',
#                   output_act=None)
# ---------------------------------------------------------------------------
@functools.partial(jax.jit, static_argnames=("num_graphs",))
def gcn_model_forward(x, edge_index, batch, params, num_graphs):
    N, F = x.shape
    w1, b1, w2, b2, wo, bo = params                     # stored as [in, out]
    H1, H2, O = w1.shape[1], w2.shape[1], wo.shape[1]

    # --- padded sizes (lane/sublane friendly) ---
    Np = _round_up(max(N, 1), 128)
    Fp = _round_up(F, 128)
    H1p = _round_up(H1, 128)
    H2p = _round_up(H2, 128)
    Op = _round_up(O, 128)
    Gp = _round_up(max(num_graphs, 1), 8)

    # --- tiling / residency policy ---
    TM = _pick_tile(Np, (512, 256, 128))
    TK = _pick_tile(Np, (2048, 1024, 512, 256, 128))
    # keep the feature operand VMEM-resident if it fits a conservative budget
    # (safe even on v7x's 64 MiB physical VMEM with double-buffered adj tiles)
    x_resident = Np * max(Fp, H1p) * 2 <= (16 << 20)
    vmem_limit = 48 * 1024 * 1024                       # > v5e's 16 MiB default, < v7x physical

    # --- glue: raw A+I built directly at padded size, int8; normalization vector ---
    src, dst = edge_index[0], edge_index[1]
    idx = jnp.arange(N)
    a = (jnp.zeros((Np, Np), jnp.float32)
         .at[dst, src].add(1.0)                          # duplicate edges sum (PyG semantics)
         .at[idx, idx].add(1.0))                         # self-loops on real nodes only
    deg = jnp.sum(a, axis=1)                             # padded rows -> 0
    d_inv_sqrt = jnp.where(deg > 0, jax.lax.rsqrt(deg), 0.0)
    adj_i8 = a.astype(jnp.int8)                          # streamed raw, half the bytes of bf16
    d_row = d_inv_sqrt.reshape(Np, 1)

    # --- glue: mean-pooling matrix [Gp, Np] (padded rows/cols are zero) ---
    seg = jnp.full((Np,), -1, jnp.int32).at[:N].set(batch)
    onehot = (seg[None, :] == jnp.arange(Gp, dtype=jnp.int32)[:, None]).astype(jnp.float32)
    counts = jnp.sum(onehot, axis=1, keepdims=True)
    pool_p = onehot / jnp.maximum(counts, 1.0)

    # --- padded inputs / parameters; column half of D^-1/2 folded into X ---
    xs = x * d_inv_sqrt[:N, None]
    x_p = jnp.zeros((Np, Fp), jnp.bfloat16).at[:N, :F].set(xs.astype(jnp.bfloat16))
    w1_p = jnp.zeros((Fp, H1p), jnp.bfloat16).at[:F, :H1].set(w1.astype(jnp.bfloat16))
    b1_p = jnp.zeros((1, H1p), jnp.float32).at[0, :H1].set(b1)
    w2_p = jnp.zeros((H1p, H2p), jnp.bfloat16).at[:H1, :H2].set(w2.astype(jnp.bfloat16))
    b2_p = jnp.zeros((1, H2p), jnp.float32).at[0, :H2].set(b2)
    wo_p = jnp.zeros((H2p, Op), jnp.float32).at[:H2, :O].set(wo)   # tiny, keep f32
    bo_p = jnp.zeros((1, Op), jnp.float32).at[0, :O].set(bo)

    # --- GCNConv 1: g1 = d * relu((Â @ X) @ W1 + b1)  (pre-scaled for layer 2) ---
    g1 = _gcn_conv_layer(adj_i8, x_p, w1_p, b1_p, d_row, tm=TM, tk=TK,
                         x_resident=x_resident, scale_out=True,
                         out_dtype=jnp.bfloat16, vmem_limit=vmem_limit)

    # --- GCNConv 2 + global_mean_pool + output Linear (identity output_act), fused ---
    out_p = _gcn_conv_pool_fc(adj_i8, g1, w2_p, b2_p, d_row, pool_p, wo_p, bo_p,
                              tm=TM, tk=TK, x_resident=x_resident,
                              vmem_limit=vmem_limit)

    return out_p[:num_graphs, :O]


# ---------------------------------------------------------------------------
# Pure-JAX f32 reference (matches the PyTorch GCNModel forward).
# ---------------------------------------------------------------------------
def _reference_forward(x, edge_index, batch, params, num_graphs):
    w1, b1, w2, b2, wo, bo = params
    N = x.shape[0]
    src, dst = edge_index[0], edge_index[1]
    a = jnp.zeros((N, N), jnp.float32).at[dst, src].add(1.0) + jnp.eye(N)
    deg = a.sum(axis=1)
    d = jnp.where(deg > 0, 1.0 / jnp.sqrt(deg), 0.0)
    adj = d[:, None] * a * d[None, :]
    h = jnp.maximum(adj @ x @ w1 + b1, 0.0)
    h = jnp.maximum(adj @ h @ w2 + b2, 0.0)
    onehot = (batch[None, :] == jnp.arange(num_graphs)[:, None]).astype(jnp.float32)
    pooled = (onehot @ h) / jnp.maximum(onehot.sum(1, keepdims=True), 1.0)
    return pooled @ wo + bo


if __name__ == "__main__":
    # Model config: GCNModel(input_dim=8, output_dim=4, hidden_dims=[32, 32], act='relu')
    input_dim, hidden_dim, output_dim = 8, 32, 4
    num_nodes, num_graphs = 16, 2

    key = jax.random.PRNGKey(0)
    kx, k1, kb1, k2, kb2, ko, kbo = jax.random.split(key, 7)

    # node features [N, F]
    x = jax.random.normal(kx, (num_nodes, input_dim), dtype=jnp.float32)

    # two ring graphs of 8 nodes each, symmetric edges
    edges = []
    for g in range(num_graphs):
        base = g * 8
        for i in range(8):
            a_n, b_n = base + i, base + (i + 1) % 8
            edges.append((a_n, b_n))
            edges.append((b_n, a_n))
    edge_index = jnp.array(edges, dtype=jnp.int32).T          # [2, E]
    batch = jnp.array([0] * 8 + [1] * 8, dtype=jnp.int32)     # graph id per node

    # deterministic parameters (stored as [in, out])
    w1 = 0.1 * jax.random.normal(k1, (input_dim, hidden_dim), dtype=jnp.float32)
    b1 = 0.1 * jax.random.normal(kb1, (hidden_dim,), dtype=jnp.float32)
    w2 = 0.1 * jax.random.normal(k2, (hidden_dim, hidden_dim), dtype=jnp.float32)
    b2 = 0.1 * jax.random.normal(kb2, (hidden_dim,), dtype=jnp.float32)
    wo = 0.1 * jax.random.normal(ko, (hidden_dim, output_dim), dtype=jnp.float32)
    bo = 0.1 * jax.random.normal(kbo, (output_dim,), dtype=jnp.float32)
    params = (w1, b1, w2, b2, wo, bo)

    out = gcn_model_forward(x, edge_index, batch, params, num_graphs=num_graphs)
    out = jax.block_until_ready(out)

    ref = _reference_forward(x, edge_index, batch, params, num_graphs)
    assert out.shape == (num_graphs, output_dim)
    assert jnp.all(jnp.isfinite(out))
    # bf16 operands / f32 accumulation: loose tolerance vs f32 reference.
    assert jnp.allclose(out, ref, atol=5e-2, rtol=2e-1), (out, ref)
    print("KERNEL_OK")
</pallas_src>

<mosaic_0001>
module attributes {stable_mosaic.version = 11 : i64} {
  func.func private @main(%arg0: i32) attributes {dimension_semantics = [#tpu.dimension_semantics<core_parallel>], iteration_bounds = array<i64: 2>, tpu.core_type = #tpu.core_type<sc_scalar_subcore>, window_params = []} {
    return
  }
}

module attributes {stable_mosaic.version = 11 : i64} {
  func.func private @main(%arg0: i32) attributes {dimension_semantics = [#tpu.dimension_semantics<core_parallel>], iteration_bounds = array<i64: 2>, tpu.core_type = #tpu.core_type<sc_scalar_subcore>, window_params = []} {
    return
  }
}

module attributes {stable_mosaic.version = 11 : i64} {
  func.func @gcn_conv_pool_fc_kernel(%arg0: i32, %arg1: i32, %arg2: memref<128x128xi8, #tpu.memory_space<vmem>>, %arg3: memref<128x128xbf16, #tpu.memory_space<vmem>>, %arg4: memref<128x128xbf16, #tpu.memory_space<vmem>>, %arg5: memref<1x128xf32, #tpu.memory_space<vmem>>, %arg6: memref<128x1xf32, #tpu.memory_space<vmem>>, %arg7: memref<8x128xf32, #tpu.memory_space<vmem>>, %arg8: memref<128x128xf32, #tpu.memory_space<vmem>>, %arg9: memref<1x128xf32, #tpu.memory_space<vmem>>, %arg10: memref<8x128xf32, #tpu.memory_space<vmem>>, %arg11: memref<128x128xf32, #tpu.memory_space<vmem>>, %arg12: memref<8x128xf32, #tpu.memory_space<vmem>>) attributes {dimension_semantics = [#tpu.dimension_semantics<arbitrary>, #tpu.dimension_semantics<arbitrary>], iteration_bounds = array<i64: 1, 1>, scalar_prefetch = 0 : i64, scratch_operands = 2 : i64, tpu.core_type = #tpu.core_type<tc>, window_params = [{transform_indices = @transform_0, window_bounds = array<i64: 128, 128>}, {pipeline_mode = #tpu.pipeline_mode<synchronous>, transform_indices = @transform_1, window_bounds = array<i64: 128, 128>}, {pipeline_mode = #tpu.pipeline_mode<synchronous>, transform_indices = @transform_2, window_bounds = array<i64: 128, 128>}, {pipeline_mode = #tpu.pipeline_mode<synchronous>, transform_indices = @transform_3, window_bounds = array<i64: 1, 128>}, {transform_indices = @transform_4, window_bounds = array<i64: 128, 1>}, {transform_indices = @transform_5, window_bounds = array<i64: 8, 128>}, {pipeline_mode = #tpu.pipeline_mode<synchronous>, transform_indices = @transform_6, window_bounds = array<i64: 128, 128>}, {pipeline_mode = #tpu.pipeline_mode<synchronous>, transform_indices = @transform_7, window_bounds = array<i64: 1, 128>}, {pipeline_mode = #tpu.pipeline_mode<synchronous>, transform_indices = @transform_8, window_bounds = array<i64: 8, 128>}]} {
    %c0_i32 = arith.constant 0 : i32
    %0 = arith.cmpi eq, %arg0, %c0_i32 : i32
    %c0_i32_0 = arith.constant 0 : i32
    %1 = arith.cmpi eq, %arg1, %c0_i32_0 : i32
    %2 = arith.andi %0, %1 : i1
    %3 = arith.extui %2 : i1 to i32
    %c0_i32_1 = arith.constant 0 : i32
    %4 = arith.cmpi ne, %3, %c0_i32_1 : i32
    scf.if %4 {
      %cst_15 = arith.constant 0.000000e+00 : f32
      %26 = vector.broadcast %cst_15 : f32 to vector<8x128xf32>
      %c0_16 = arith.constant 0 : index
      %c0_17 = arith.constant 0 : index
      %27 = vector.load %arg12[%c0_16, %c0_17] : memref<8x128xf32, #tpu.memory_space<vmem>>, vector<8x128xf32>
      tpu.vector_store %arg12[%c0_16, %c0_17], %26 {strides = array<i32>} : memref<8x128xf32, #tpu.memory_space<vmem>>, vector<8x128xf32>,
    } else {
    }
    %c0_i32_2 = arith.constant 0 : i32
    %5 = arith.cmpi eq, %arg1, %c0_i32_2 : i32
    %6 = arith.extui %5 : i1 to i32
    %c0_i32_3 = arith.constant 0 : i32
    %7 = arith.cmpi ne, %6, %c0_i32_3 : i32
    scf.if %7 {
      %cst_15 = arith.constant 0.000000e+00 : f32
      %26 = vector.broadcast %cst_15 : f32 to vector<128x128xf32>
      %c0_16 = arith.constant 0 : index
      %c0_17 = arith.constant 0 : index
      %27 = vector.load %arg11[%c0_16, %c0_17] : memref<128x128xf32, #tpu.memory_space<vmem>>, vector<128x128xf32>
      tpu.vector_store %arg11[%c0_16, %c0_17], %26 {strides = array<i32>} : memref<128x128xf32, #tpu.memory_space<vmem>>, vector<128x128xf32>,
    } else {
    }
    %c128_i32 = arith.constant 128 : i32
    %8 = arith.muli %arg1, %c128_i32 : i32
    %9 = tpu.assume_multiple %8, 128 : i32
    %10 = arith.index_cast %9 : i32 to index
    %c0 = arith.constant 0 : index
    %11 = vector.load %arg3[%10, %c0] : memref<128x128xbf16, #tpu.memory_space<vmem>>, vector<128x128xbf16>
    %c0_4 = arith.constant 0 : index
    %c0_5 = arith.constant 0 : index
    %12 = vector.load %arg11[%c0_4, %c0_5] : memref<128x128xf32, #tpu.memory_space<vmem>>, vector<128x128xf32>
    %c0_6 = arith.constant 0 : index
    %c0_7 = arith.constant 0 : index
    %13 = vector.load %arg2[%c0_6, %c0_7] : memref<128x128xi8, #tpu.memory_space<vmem>>, vector<128x128xi8>
    %14 = arith.sitofp %13 : vector<128x128xi8> to vector<128x128xbf16>
    %cst = arith.constant dense<0.000000e+00> : vector<128x128xf32>
    %15 = tpu.matmul %14, %11, %cst {dimension_numbers = #tpu.dot_dimension_numbers<[1], [0], [0], [1], [0, 0, 1, 1], [], []>} : vector<128x128xbf16>, vector<128x128xbf16>, vector<128x128xf32> -> vector<128x128xf32>
    %16 = arith.addf %12, %15 : vector<128x128xf32>
    %c0_8 = arith.constant 0 : index
    %c0_9 = arith.constant 0 : index
    %17 = vector.load %arg11[%c0_8, %c0_9] : memref<128x128xf32, #tpu.memory_space<vmem>>, vector<128x128xf32>
    tpu.vector_store %arg11[%c0_8, %c0_9], %16 {strides = array<i32>} : memref<128x128xf32, #tpu.memory_space<vmem>>, vector<128x128xf32>,
    %c0_i32_10 = arith.constant 0 : i32
    %18 = arith.cmpi eq, %arg1, %c0_i32_10 : i32
    %19 = arith.extui %18 : i1 to i32
    %c0_i32_11 = arith.constant 0 : i32
    %20 = arith.cmpi ne, %19, %c0_i32_11 : i32
    scf.if %20 {
      %c0_15 = arith.constant 0 : index
      %c0_16 = arith.constant 0 : index
      %26 = vector.load %arg11[%c0_15, %c0_16] : memref<128x128xf32, #tpu.memory_space<vmem>>, vector<128x128xf32>
      %c0_17 = arith.constant 0 : index
      %c0_18 = arith.constant 0 : index
      %27 = vector.load %arg6[%c0_17, %c0_18] : memref<128x1xf32, #tpu.memory_space<vmem>>, vector<128x1xf32>
      %28 = vector.broadcast %27 : vector<128x1xf32> to vector<128x128xf32>
      %29 = arith.mulf %26, %28 : vector<128x128xf32>
      %30 = arith.truncf %29 : vector<128x128xf32> to vector<128x128xbf16>
      %c0_19 = arith.constant 0 : index
      %c0_20 = arith.constant 0 : index
      %31 = vector.load %arg4[%c0_19, %c0_20] : memref<128x128xbf16, #tpu.memory_space<vmem>>, vector<128x128xbf16>
      %cst_21 = arith.constant dense<0.000000e+00> : vector<128x128xf32>
      %32 = tpu.matmul %30, %31, %cst_21 {dimension_numbers = #tpu.dot_dimension_numbers<[1], [0], [0], [1], [0, 0, 1, 1], [], []>} : vector<128x128xbf16>, vector<128x128xbf16>, vector<128x128xf32> -> vector<128x128xf32>
      %c0_22 = arith.constant 0 : index
      %c0_23 = arith.constant 0 : index
      %33 = vector.load %arg5[%c0_22, %c0_23] : memref<1x128xf32, #tpu.memory_space<vmem>>, vector<1x128xf32>
      %34 = vector.broadcast %33 : vector<1x128xf32> to vector<128x128xf32>
      %35 = arith.addf %32, %34 : vector<128x128xf32>
      %cst_24 = arith.constant 0.000000e+00 : f32
      %36 = vector.broadcast %cst_24 : f32 to vector<128x128xf32>
      %37 = arith.maximumf %35, %36 : vector<128x128xf32>
      %c0_25 = arith.constant 0 : index
      %c0_26 = arith.constant 0 : index
      %38 = vector.load %arg12[%c0_25, %c0_26] : memref<8x128xf32, #tpu.memory_space<vmem>>, vector<8x128xf32>
      %c0_27 = arith.constant 0 : index
      %c0_28 = arith.constant 0 : index
      %39 = vector.load %arg7[%c0_27, %c0_28] : memref<8x128xf32, #tpu.memory_space<vmem>>, vector<8x128xf32>
      %cst_29 = arith.constant dense<0.000000e+00> : vector<8x128xf32>
      %40 = tpu.matmul %39, %37, %cst_29 {dimension_numbers = #tpu.dot_dimension_numbers<[1], [0], [0], [1], [0, 0, 1, 1], [], []>} : vector<8x128xf32>, vector<128x128xf32>, vector<8x128xf32> -> vector<8x128xf32>
      %41 = arith.addf %38, %40 : vector<8x128xf32>
      %c0_30 = arith.constant 0 : index
      %c0_31 = arith.constant 0 : index
      %42 = vector.load %arg12[%c0_30, %c0_31] : memref<8x128xf32, #tpu.memory_space<vmem>>, vector<8x128xf32>
      tpu.vector_store %arg12[%c0_30, %c0_31], %41 {strides = array<i32>} : memref<8x128xf32, #tpu.memory_space<vmem>>, vector<8x128xf32>,
    } else {
    }
    %c0_i32_12 = arith.constant 0 : i32
    %21 = arith.cmpi eq, %arg0, %c0_i32_12 : i32
    %c0_i32_13 = arith.constant 0 : i32
    %22 = arith.cmpi eq, %arg1, %c0_i32_13 : i32
    %23 = arith.andi %21, %22 : i1
    %24 = arith.extui %23 : i1 to i32
    %c0_i32_14 = arith.constant 0 : i32
    %25 = arith.cmpi ne, %24, %c0_i32_14 : i32
    scf.if %25 {
      %c0_15 = arith.constant 0 : index
      %c0_16 = arith.constant 0 : index
      %26 = vector.load %arg12[%c0_15, %c0_16] : memref<8x128xf32, #tpu.memory_space<vmem>>, vector<8x128xf32>
      %c0_17 = arith.constant 0 : index
      %c0_18 = arith.constant 0 : index
      %27 = vector.load %arg8[%c0_17, %c0_18] : memref<128x128xf32, #tpu.memory_space<vmem>>, vector<128x128xf32>
      %cst_19 = arith.constant dense<0.000000e+00> : vector<8x128xf32>
      %28 = tpu.matmul %26, %27, %cst_19 {dimension_numbers = #tpu.dot_dimension_numbers<[1], [0], [0], [1], [0, 0, 1, 1], [], []>} : vector<8x128xf32>, vector<128x128xf32>, vector<8x128xf32> -> vector<8x128xf32>
      %c0_20 = arith.constant 0 : index
      %c0_21 = arith.constant 0 : index
      %29 = vector.load %arg9[%c0_20, %c0_21] : memref<1x128xf32, #tpu.memory_space<vmem>>, vector<1x128xf32>
      %30 = vector.broadcast %29 : vector<1x128xf32> to vector<8x128xf32>
      %31 = arith.addf %28, %30 : vector<8x128xf32>
      %c0_22 = arith.constant 0 : index
      %c0_23 = arith.constant 0 : index
      %32 = vector.load %arg10[%c0_22, %c0_23] : memref<8x128xf32, #tpu.memory_space<vmem>>, vector<8x128xf32>
      tpu.vector_store %arg10[%c0_22, %c0_23], %31 {strides = array<i32>} : memref<8x128xf32, #tpu.memory_space<vmem>>, vector<8x128xf32>,
    } else {
    }
    return
  }
  func.func @transform_0(%arg0: i32, %arg1: i32) -> (i32, i32) {
    %c0_i32 = arith.constant 0 : i32
    return %arg0, %arg1 : i32, i32
  }
  func.func @transform_1(%arg0: i32, %arg1: i32) -> (i32, i32) {
    %c0_i32 = arith.constant 0 : i32
    %c0_i32_0 = arith.constant 0 : i32
    %c0_i32_1 = arith.constant 0 : i32
    return %c0_i32, %c0_i32_0 : i32, i32
  }
  func.func @transform_2(%arg0: i32, %arg1: i32) -> (i32, i32) {
    %c0_i32 = arith.constant 0 : i32
    %c0_i32_0 = arith.constant 0 : i32
    %c0_i32_1 = arith.constant 0 : i32
    return %c0_i32, %c0_i32_0 : i32, i32
  }
  func.func @transform_3(%arg0: i32, %arg1: i32) -> (i32, i32) {
    %c0_i32 = arith.constant 0 : i32
    %c0_i32_0 = arith.constant 0 : i32
    %c0_i32_1 = arith.constant 0 : i32
    return %c0_i32, %c0_i32_0 : i32, i32
  }
  func.func @transform_4(%arg0: i32, %arg1: i32) -> (i32, i32) {
    %c0_i32 = arith.constant 0 : i32
    %c0_i32_0 = arith.constant 0 : i32
    return %arg0, %c0_i32 : i32, i32
  }
  func.func @transform_5(%arg0: i32, %arg1: i32) -> (i32, i32) {
    %c0_i32 = arith.constant 0 : i32
    %c0_i32_0 = arith.constant 0 : i32
    return %c0_i32, %arg0 : i32, i32
  }
  func.func @transform_6(%arg0: i32, %arg1: i32) -> (i32, i32) {
    %c0_i32 = arith.constant 0 : i32
    %c0_i32_0 = arith.constant 0 : i32
    %c0_i32_1 = arith.constant 0 : i32
    return %c0_i32, %c0_i32_0 : i32, i32
  }
  func.func @transform_7(%arg0: i32, %arg1: i32) -> (i32, i32) {
    %c0_i32 = arith.constant 0 : i32
    %c0_i32_0 = arith.constant 0 : i32
    %c0_i32_1 = arith.constant 0 : i32
    return %c0_i32, %c0_i32_0 : i32, i32
  }
  func.func @transform_8(%arg0: i32, %arg1: i32) -> (i32, i32) {
    %c0_i32 = arith.constant 0 : i32
    %c0_i32_0 = arith.constant 0 : i32
    %c0_i32_1 = arith.constant 0 : i32
    return %c0_i32, %c0_i32_0 : i32, i32
  }
}

module attributes {stable_mosaic.version = 11 : i64} {
  func.func @gcn_conv_kernel(%arg0: i32, %arg1: i32, %arg2: memref<128x128xi8, #tpu.memory_space<vmem>>, %arg3: memref<128x128xbf16, #tpu.memory_space<vmem>>, %arg4: memref<128x128xbf16, #tpu.memory_space<vmem>>, %arg5: memref<1x128xf32, #tpu.memory_space<vmem>>, %arg6: memref<128x1xf32, #tpu.memory_space<vmem>>, %arg7: memref<128x128xbf16, #tpu.memory_space<vmem>>, %arg8: memref<128x128xf32, #tpu.memory_space<vmem>>) attributes {dimension_semantics = [#tpu.dimension_semantics<parallel>, #tpu.dimension_semantics<arbitrary>], iteration_bounds = array<i64: 1, 1>, scalar_prefetch = 0 : i64, scratch_operands = 1 : i64, tpu.core_type = #tpu.core_type<tc>, window_params = [{transform_indices = @transform_0, window_bounds = array<i64: 128, 128>}, {pipeline_mode = #tpu.pipeline_mode<synchronous>, transform_indices = @transform_1, window_bounds = array<i64: 128, 128>}, {pipeline_mode = #tpu.pipeline_mode<synchronous>, transform_indices = @transform_2, window_bounds = array<i64: 128, 128>}, {pipeline_mode = #tpu.pipeline_mode<synchronous>, transform_indices = @transform_3, window_bounds = array<i64: 1, 128>}, {transform_indices = @transform_4, window_bounds = array<i64: 128, 1>}, {transform_indices = @transform_5, window_bounds = array<i64: 128, 128>}]} {
    %c0_i32 = arith.constant 0 : i32
    %0 = arith.cmpi eq, %arg1, %c0_i32 : i32
    %1 = arith.extui %0 : i1 to i32
    %c0_i32_0 = arith.constant 0 : i32
    %2 = arith.cmpi ne, %1, %c0_i32_0 : i32
    scf.if %2 {
      %cst_9 = arith.constant 0.000000e+00 : f32
      %16 = vector.broadcast %cst_9 : f32 to vector<128x128xf32>
      %c0_10 = arith.constant 0 : index
      %c0_11 = arith.constant 0 : index
      %17 = vector.load %arg8[%c0_10, %c0_11] : memref<128x128xf32, #tpu.memory_space<vmem>>, vector<128x128xf32>
      tpu.vector_store %arg8[%c0_10, %c0_11], %16 {strides = array<i32>} : memref<128x128xf32, #tpu.memory_space<vmem>>, vector<128x128xf32>,
    } else {
    }
    %c128_i32 = arith.constant 128 : i32
    %3 = arith.muli %arg1, %c128_i32 : i32
    %4 = tpu.assume_multiple %3, 128 : i32
    %5 = arith.index_cast %4 : i32 to index
    %c0 = arith.constant 0 : index
    %6 = vector.load %arg3[%5, %c0] : memref<128x128xbf16, #tpu.memory_space<vmem>>, vector<128x128xbf16>
    %c0_1 = arith.constant 0 : index
    %c0_2 = arith.constant 0 : index
    %7 = vector.load %arg8[%c0_1, %c0_2] : memref<128x128xf32, #tpu.memory_space<vmem>>, vector<128x128xf32>
    %c0_3 = arith.constant 0 : index
    %c0_4 = arith.constant 0 : index
    %8 = vector.load %arg2[%c0_3, %c0_4] : memref<128x128xi8, #tpu.memory_space<vmem>>, vector<128x128xi8>
    %9 = arith.sitofp %8 : vector<128x128xi8> to vector<128x128xbf16>
    %cst = arith.constant dense<0.000000e+00> : vector<128x128xf32>
    %10 = tpu.matmul %9, %6, %cst {dimension_numbers = #tpu.dot_dimension_numbers<[1], [0], [0], [1], [0, 0, 1, 1], [], []>} : vector<128x128xbf16>, vector<128x128xbf16>, vector<128x128xf32> -> vector<128x128xf32>
    %11 = arith.addf %7, %10 : vector<128x128xf32>
    %c0_5 = arith.constant 0 : index
    %c0_6 = arith.constant 0 : index
    %12 = vector.load %arg8[%c0_5, %c0_6] : memref<128x128xf32, #tpu.memory_space<vmem>>, vector<128x128xf32>
    tpu.vector_store %arg8[%c0_5, %c0_6], %11 {strides = array<i32>} : memref<128x128xf32, #tpu.memory_space<vmem>>, vector<128x128xf32>,
    %c0_i32_7 = arith.constant 0 : i32
    %13 = arith.cmpi eq, %arg1, %c0_i32_7 : i32
    %14 = arith.extui %13 : i1 to i32
    %c0_i32_8 = arith.constant 0 : i32
    %15 = arith.cmpi ne, %14, %c0_i32_8 : i32
    scf.if %15 {
      %c0_9 = arith.constant 0 : index
      %c0_10 = arith.constant 0 : index
      %16 = vector.load %arg8[%c0_9, %c0_10] : memref<128x128xf32, #tpu.memory_space<vmem>>, vector<128x128xf32>
      %c0_11 = arith.constant 0 : index
      %c0_12 = arith.constant 0 : index
      %17 = vector.load %arg6[%c0_11, %c0_12] : memref<128x1xf32, #tpu.memory_space<vmem>>, vector<128x1xf32>
      %18 = vector.broadcast %17 : vector<128x1xf32> to vector<128x128xf32>
      %19 = arith.mulf %16, %18 : vector<128x128xf32>
      %20 = arith.truncf %19 : vector<128x128xf32> to vector<128x128xbf16>
      %c0_13 = arith.constant 0 : index
      %c0_14 = arith.constant 0 : index
      %21 = vector.load %arg4[%c0_13, %c0_14] : memref<128x128xbf16, #tpu.memory_space<vmem>>, vector<128x128xbf16>
      %cst_15 = arith.constant dense<0.000000e+00> : vector<128x128xf32>
      %22 = tpu.matmul %20, %21, %cst_15 {dimension_numbers = #tpu.dot_dimension_numbers<[1], [0], [0], [1], [0, 0, 1, 1], [], []>} : vector<128x128xbf16>, vector<128x128xbf16>, vector<128x128xf32> -> vector<128x128xf32>
      %c0_16 = arith.constant 0 : index
      %c0_17 = arith.constant 0 : index
      %23 = vector.load %arg5[%c0_16, %c0_17] : memref<1x128xf32, #tpu.memory_space<vmem>>, vector<1x128xf32>
      %24 = vector.broadcast %23 : vector<1x128xf32> to vector<128x128xf32>
      %25 = arith.addf %22, %24 : vector<128x128xf32>
      %cst_18 = arith.constant 0.000000e+00 : f32
      %26 = vector.broadcast %cst_18 : f32 to vector<128x128xf32>
      %27 = arith.maximumf %25, %26 : vector<128x128xf32>
      %c0_19 = arith.constant 0 : index
      %c0_20 = arith.constant 0 : index
      %28 = vector.load %arg6[%c0_19, %c0_20] : memref<128x1xf32, #tpu.memory_space<vmem>>, vector<128x1xf32>
      %29 = vector.broadcast %28 : vector<128x1xf32> to vector<128x128xf32>
      %30 = arith.mulf %27, %29 : vector<128x128xf32>
      %31 = arith.truncf %30 : vector<128x128xf32> to vector<128x128xbf16>
      %c0_21 = arith.constant 0 : index
      %c0_22 = arith.constant 0 : index
      %32 = vector.load %arg7[%c0_21, %c0_22] : memref<128x128xbf16, #tpu.memory_space<vmem>>, vector<128x128xbf16>
      tpu.vector_store %arg7[%c0_21, %c0_22], %31 {strides = array<i32>} : memref<128x128xbf16, #tpu.memory_space<vmem>>, vector<128x128xbf16>,
    } else {
    }
    return
  }
  func.func @transform_0(%arg0: i32, %arg1: i32) -> (i32, i32) {
    %c0_i32 = arith.constant 0 : i32
    return %arg0, %arg1 : i32, i32
  }
  func.func @transform_1(%arg0: i32, %arg1: i32) -> (i32, i32) {
    %c0_i32 = arith.constant 0 : i32
    %c0_i32_0 = arith.constant 0 : i32
    %c0_i32_1 = arith.constant 0 : i32
    return %c0_i32, %c0_i32_0 : i32, i32
  }
  func.func @transform_2(%arg0: i32, %arg1: i32) -> (i32, i32) {
    %c0_i32 = arith.constant 0 : i32
    %c0_i32_0 = arith.constant 0 : i32
    %c0_i32_1 = arith.constant 0 : i32
    return %c0_i32, %c0_i32_0 : i32, i32
  }
  func.func @transform_3(%arg0: i32, %arg1: i32) -> (i32, i32) {
    %c0_i32 = arith.constant 0 : i32
    %c0_i32_0 = arith.constant 0 : i32
    %c0_i32_1 = arith.constant 0 : i32
    return %c0_i32, %c0_i32_0 : i32, i32
  }
  func.func @transform_4(%arg0: i32, %arg1: i32) -> (i32, i32) {
    %c0_i32 = arith.constant 0 : i32
    %c0_i32_0 = arith.constant 0 : i32
    return %arg0, %c0_i32 : i32, i32
  }
  func.func @transform_5(%arg0: i32, %arg1: i32) -> (i32, i32) {
    %c0_i32 = arith.constant 0 : i32
    %c0_i32_0 = arith.constant 0 : i32
    return %arg0, %c0_i32 : i32, i32
  }
}

</mosaic_0001>

<llo_original>
// kernel: gcn_model_forward.3
$region0: #{gcn_model_forward.3}
  #allocation0 [shape = 'u32[]', space=smem, size = 0x4, offset = 0x4, fixed_abs, tag = 'smem constant byte address 0x4 - core index']
  #allocation1 [shape = 'u32[144,128]{1,0:T(1,128)}', space=vmem, size = 0x12000, scoped, tag = 'internal scratch']
  #allocation2 [shape = 'f32[128,128]{1,0:T(8,128)}', space=vmem, size = 0x10000, scoped, tag = 'scratch operand']
  #allocation3 [shape = 'f32[8,128]{1,0:T(8,128)}', space=vmem, size = 0x1000, scoped, tag = 'scratch operand']
  %s0 = inlined_call_operand.vmem [shape: s8[128,128], index: 0, kind: input, shape index: {}]
  %s1 = inlined_call_operand.vmem [shape: bf16[128,128], index: 1, kind: input, shape index: {}]
  %s2 = inlined_call_operand.vmem [shape: bf16[128,128], index: 2, kind: input, shape index: {}]
  %s3 = inlined_call_operand.vmem [shape: f32[1,128], index: 3, kind: input, shape index: {}]
  %s4 = inlined_call_operand.vmem [shape: f32[128,1], index: 4, kind: input, shape index: {}]
  %s5 = inlined_call_operand.vmem [shape: f32[8,128], index: 5, kind: input, shape index: {}]
  %s6 = inlined_call_operand.vmem [shape: f32[128,128], index: 6, kind: input, shape index: {}]
  %s7 = inlined_call_operand.vmem [shape: f32[1,128], index: 7, kind: input, shape index: {}]
  %s8 = inlined_call_operand.vmem [shape: f32[8,128], index: 8, kind: output, shape index: {}]
  %s9 = sld [smem:[#allocation0]]
  $region58: #{gcn_model_forward.3} parent=0
    _
  %s11 = ssub.s32 1, %s9
  %s12 = scalar_select 0, %s11, %s9
  // Predicated region
  $region2: #{gcn_model_forward.3} parent=0 // pred_check
    _
  $region3: #{gcn_model_forward.3} parent=0 // pred_check_branch
    %14 = sbr.rel (0) target = $region5
  $region4: #{gcn_model_forward.3} parent=0 // pred_region
    _
  $region5: #{gcn_model_forward.3} parent=0 // pred_fallthru
    _
  // Predicated region
  $region6: #{gcn_model_forward.3} parent=0 // pred_check
    _
  $region7: #{gcn_model_forward.3} parent=0 // pred_check_branch
    %16 = sbr.rel (0) target = $region9
  $region8: #{gcn_model_forward.3} parent=0 // pred_region
    _
  $region9: #{gcn_model_forward.3} parent=0 // pred_fallthru
    _
  // Predicated region
  $region10: #{gcn_model_forward.3} parent=0 // pred_check
    _
  $region11: #{gcn_model_forward.3} parent=0 // pred_check_branch
    %18 = sbr.rel (0) target = $region13
  $region12: #{gcn_model_forward.3} parent=0 // pred_region
    _
  $region13: #{gcn_model_forward.3} parent=0 // pred_fallthru
    _
  // Predicated region
  $region14: #{gcn_model_forward.3} parent=0 // pred_check
    _
  $region15: #{gcn_model_forward.3} parent=0 // pred_check_branch
    %20 = sbr.rel (0) target = $region17
  $region16: #{gcn_model_forward.3} parent=0 // pred_region
    _
  $region17: #{gcn_model_forward.3} parent=0 // pred_fallthru
    _
  // Predicated region
  $region18: #{gcn_model_forward.3} parent=0 // pred_check
    _
  $region19: #{gcn_model_forward.3} parent=0 // pred_check_branch
    %22 = sbr.rel (0) target = $region21
  $region20: #{gcn_model_forward.3} parent=0 // pred_region
    _
  $region21: #{gcn_model_forward.3} parent=0 // pred_fallthru
    _
  // Predicated region
  $region22: #{gcn_model_forward.3} parent=0 // pred_check
    _
  $region23: #{gcn_model_forward.3} parent=0 // pred_check_branch
    %24 = sbr.rel (0) target = $region25
  $region24: #{gcn_model_forward.3} parent=0 // pred_region
    _
  $region25: #{gcn_model_forward.3} parent=0 // pred_fallthru
    _
  // Predicated region
  $region26: #{gcn_model_forward.3} parent=0 // pred_check
    _
  $region27: #{gcn_model_forward.3} parent=0 // pred_check_branch
    %26 = sbr.rel (0) target = $region29
  $region28: #{gcn_model_forward.3} parent=0 // pred_region
    _
  $region29: #{gcn_model_forward.3} parent=0 // pred_fallthru
    _
  // Predicated region
  $region30: #{gcn_model_forward.3} parent=0 // pred_check
    _
  $region31: #{gcn_model_forward.3} parent=0 // pred_check_branch
    %28 = sbr.rel (0) target = $region33
  $region32: #{gcn_model_forward.3} parent=0 // pred_region
    _
  $region33: #{gcn_model_forward.3} parent=0 // pred_fallthru
    _
  %p30 = scmp.eq.s32.totalorder 0, 0
  %p31 = scmp.eq.s32.totalorder 0, 0
  %p32 = pnand %p30, %p31
  %p33 = pneg %p32
  // Predicated region
  $region34: #{gcn_model_forward.3} parent=0 // pred_check
    _
  $region35: #{gcn_model_forward.3} parent=0 // pred_check_branch
    %35 = sbr.rel (%p32) target = $region37
  $region36: #{gcn_model_forward.3} parent=0 // pred_region
    %36 = vst [vmem:[#allocation3] sm:$0xff] 0.0
  $region37: #{gcn_model_forward.3} parent=0 // pred_fallthru
    _
  // Predicated region
  $region38: #{gcn_model_forward.3} parent=0 // pred_check
    %p37 = pneg %p31
  $region39: #{gcn_model_forward.3} parent=0 // pred_check_branch
    %39 = sbr.rel (%p37) target = $region41
  $region40: #{gcn_model_forward.3} parent=0 // pred_region
    %40 = vst [vmem:[#allocation2] sm:$0xff] 0.0
    %41 = vst [vmem:[#allocation2 + $0x8] sm:$0xff] 0.0
    %42 = vst [vmem:[#allocation2 + $0x10] sm:$0xff] 0.0
    %43 = vst [vmem:[#allocation2 + $0x18] sm:$0xff] 0.0
    %44 = vst [vmem:[#allocation2 + $0x20] sm:$0xff] 0.0
    %45 = vst [vmem:[#allocation2 + $0x28] sm:$0xff] 0.0
    %46 = vst [vmem:[#allocation2 + $0x30] sm:$0xff] 0.0
    %47 = vst [vmem:[#allocation2 + $0x38] sm:$0xff] 0.0
    %48 = vst [vmem:[#allocation2 + $0x40] sm:$0xff] 0.0
    %49 = vst [vmem:[#allocation2 + $0x48] sm:$0xff] 0.0
    %50 = vst [vmem:[#allocation2 + $0x50] sm:$0xff] 0.0
    %51 = vst [vmem:[#allocation2 + $0x58] sm:$0xff] 0.0
    %52 = vst [vmem:[#allocation2 + $0x60] sm:$0xff] 0.0
    %53 = vst [vmem:[#allocation2 + $0x68] sm:$0xff] 0.0
    %54 = vst [vmem:[#allocation2 + $0x70] sm:$0xff] 0.0
    %55 = vst [vmem:[#allocation2 + $0x78] sm:$0xff] 0.0
  $region41: #{gcn_model_forward.3} parent=0 // pred_fallthru
    _
  %s56 = smul.u32 0, 128
  %s57 = sshra.s32 %s56, 3
  %s58 = sand.u32 %s56, 7
  %s59 = smul.addr %s57, 4
  %s60 = scalar_lea.vmem %s1, %s59
  %v61 = vld [vmem:[%s60] sm:$0xf]
  %v62 = vld [vmem:[%s60 + $0x4] sm:$0xf]
  %v63 = vld [vmem:[%s60 + $0x8] sm:$0xf]
  %v64 = vld [vmem:[%s60 + $0xc] sm:$0xf]
  %v65 = vld [vmem:[%s60 + $0x10] sm:$0xf]
  %v66 = vld [vmem:[%s60 + $0x14] sm:$0xf]
  %v67 = vld [vmem:[%s60 + $0x18] sm:$0xf]
  %v68 = vld [vmem:[%s60 + $0x1c] sm:$0xf]
  %v69 = vld [vmem:[%s60 + $0x20] sm:$0xf]
  %v70 = vld [vmem:[%s60 + $0x24] sm:$0xf]
  %v71 = vld [vmem:[%s60 + $0x28] sm:$0xf]
  %v72 = vld [vmem:[%s60 + $0x2c] sm:$0xf]
  %v73 = vld [vmem:[%s60 + $0x30] sm:$0xf]
  %v74 = vld [vmem:[%s60 + $0x34] sm:$0xf]
  %v75 = vld [vmem:[%s60 + $0x38] sm:$0xf]
  %v76 = vld [vmem:[%s60 + $0x3c] sm:$0xf]
  %v77 = vld [vmem:[#allocation2] sm:$0xff]
  %v78 = vld [vmem:[#allocation2 + $0x8] sm:$0xff]
  %v79 = vld [vmem:[#allocation2 + $0x10] sm:$0xff]
  %v80 = vld [vmem:[#allocation2 + $0x18] sm:$0xff]
  %v81 = vld [vmem:[#allocation2 + $0x20] sm:$0xff]
  %v82 = vld [vmem:[#allocation2 + $0x28] sm:$0xff]
  %v83 = vld [vmem:[#allocation2 + $0x30] sm:$0xff]
  %v84 = vld [vmem:[#allocation2 + $0x38] sm:$0xff]
  %v85 = vld [vmem:[#allocation2 + $0x40] sm:$0xff]
  %v86 = vld [vmem:[#allocation2 + $0x48] sm:$0xff]
  %v87 = vld [vmem:[#allocation2 + $0x50] sm:$0xff]
  %v88 = vld [vmem:[#allocation2 + $0x58] sm:$0xff]
  %v89 = vld [vmem:[#allocation2 + $0x60] sm:$0xff]
  %v90 = vld [vmem:[#allocation2 + $0x68] sm:$0xff]
  %v91 = vld [vmem:[#allocation2 + $0x70] sm:$0xff]
  %v92 = vld [vmem:[#allocation2 + $0x78] sm:$0xff]
  %v93 = vld [vmem:[%s0] sm:$0xff]
  %v94 = vld [vmem:[%s0 + $0x8] sm:$0xff]
  %v95 = vld [vmem:[%s0 + $0x10] sm:$0xff]
  %v96 = vld [vmem:[%s0 + $0x18] sm:$0xff]
  %v97 = vunpack.c.l.s8.bf16 %v93
  %v98 = vunpack.c.h.s8.bf16 %v93
  %v99 = vunpack.c.l.s8.bf16 %v94
  %v100 = vunpack.c.h.s8.bf16 %v94
  %v101 = vunpack.c.l.s8.bf16 %v95
  %v102 = vunpack.c.h.s8.bf16 %v95
  %v103 = vunpack.c.l.s8.bf16 %v96
  %v104 = vunpack.c.h.s8.bf16 %v96
  %v121 = vunpack.c.l.b16 %v61
  %v122 = vunpack.c.l.b16 %v62
  %v123 = vunpack.c.l.b16 %v63
  %v124 = vunpack.c.l.b16 %v64
  %v125 = vunpack.c.l.b16 %v65
  %v126 = vunpack.c.l.b16 %v66
  %v127 = vunpack.c.l.b16 %v67
  %v128 = vunpack.c.l.b16 %v68
  %v129 = vunpack.c.l.b16 %v69
  %v130 = vunpack.c.l.b16 %v70
  %v131 = vunpack.c.l.b16 %v71
  %v132 = vunpack.c.l.b16 %v72
  %v133 = vunpack.c.l.b16 %v73
  %v134 = vunpack.c.l.b16 %v74
  %v135 = vunpack.c.l.b16 %v75
  %v136 = vunpack.c.l.b16 %v76
  %v137 = vpack.c.b16 %v122, %v121
  %v138 = vpack.c.b16 %v124, %v123
  %v139 = vpack.c.b16 %v126, %v125
  %v140 = vpack.c.b16 %v128, %v127
  %v141 = vpack.c.b16 %v130, %v129
  %v142 = vpack.c.b16 %v132, %v131
  %v143 = vpack.c.b16 %v134, %v133
  %v144 = vpack.c.b16 %v136, %v135
  %153 = vmatprep.subr.bf16.mxu0 0
  %154 = vmatpush1.bf16.msra.mxu0 %v137
  %155 = vmatprep.subr.bf16.mxu0 0
  %156 = vmatpush1.bf16.msra.mxu0 %v138
  %157 = vmatprep.subr.bf16.mxu0 0
  %158 = vmatpush1.bf16.msra.mxu0 %v139
  %159 = vmatprep.subr.bf16.mxu0 0
  %160 = vmatpush1.bf16.msra.mxu0 %v140
  %161 = vmatprep.subr.bf16.mxu0 0
  %162 = vmatpush1.bf16.msra.mxu0 %v141
  %163 = vmatprep.subr.bf16.mxu0 0
  %164 = vmatpush1.bf16.msra.mxu0 %v142
  %165 = vmatprep.subr.bf16.mxu0 0
  %166 = vmatpush1.bf16.msra.mxu0 %v143
  %167 = vmatprep.subr.bf16.mxu0 0
  %168 = vmatpush1.bf16.msra.mxu0 %v144
  %169 = vmatprep.subr.bf16.mxu0 0
  %170 = vmatpush1.bf16.msra.mxu0 0
  %171 = vmatprep.subr.bf16.mxu0 0
  %172 = vmatpush1.bf16.msra.mxu0 0
  %173 = vmatprep.subr.bf16.mxu0 0
  %174 = vmatpush1.bf16.msra.mxu0 0
  %175 = vmatprep.subr.bf16.mxu0 0
  %176 = vmatpush1.bf16.msra.mxu0 0
  %177 = vmatprep.subr.bf16.mxu0 0
  %178 = vmatpush1.bf16.msra.mxu0 0
  %179 = vmatprep.subr.bf16.mxu0 0
  %180 = vmatpush1.bf16.msra.mxu0 0
  %181 = vmatprep.subr.bf16.mxu0 0
  %182 = vmatpush1.bf16.msra.mxu0 0
  %183 = vmatprep.subr.bf16.mxu0 0
  %184 = vmatpush1.bf16.msra.mxu0 0
  %185 = vmatprep.mubr.bf16.mxu0 0
  %186 = vmatmul.mubr.bf16.gmra.mrb[0].mxu0 %v97
  %v187 = vpop.f32.mrb[0].mxu0
  %v188 = vadd.f32 0.0, %v187
  %v189 = vpop.f32.mrb[0].mxu0
  %v190 = vpop.f32.mrb[0].mxu0
  %v191 = vadd.f32 0.0, %v190
  %v192 = vpop.f32.mrb[0].mxu0
  %193 = vmatprep.mubr.bf16.mxu0 0
  %194 = vmatmul.mubr.bf16.gmra.mrb[0].mxu0 %v98
  %v195 = vpop.f32.mrb[0].mxu0
  %v196 = vadd.f32 0.0, %v195
  %v197 = vpop.f32.mrb[0].mxu0
  %v198 = vpop.f32.mrb[0].mxu0
  %v199 = vadd.f32 0.0, %v198
  %v200 = vpop.f32.mrb[0].mxu0
  %201 = vmatprep.mubr.bf16.mxu0 0
  %202 = vmatmul.mubr.bf16.gmra.mrb[0].mxu0 %v99
  %v203 = vpop.f32.mrb[0].mxu0
  %v204 = vadd.f32 0.0, %v203
  %v205 = vpop.f32.mrb[0].mxu0
  %v206 = vpop.f32.mrb[0].mxu0
  %v207 = vadd.f32 0.0, %v206
  %v208 = vpop.f32.mrb[0].mxu0
  %209 = vmatprep.mubr.bf16.mxu0 0
  %210 = vmatmul.mubr.bf16.gmra.mrb[0].mxu0 %v100
  %v211 = vpop.f32.mrb[0].mxu0
  %v212 = vadd.f32 0.0, %v211
  %v213 = vpop.f32.mrb[0].mxu0
  %v214 = vpop.f32.mrb[0].mxu0
  %v215 = vadd.f32 0.0, %v214
  %v216 = vpop.f32.mrb[0].mxu0
  %217 = vmatprep.mubr.bf16.mxu0 0
  %218 = vmatmul.mubr.bf16.gmra.mrb[0].mxu0 %v101
  %v219 = vpop.f32.mrb[0].mxu0
  %v220 = vadd.f32 0.0, %v219
  %v221 = vpop.f32.mrb[0].mxu0
  %v222 = vpop.f32.mrb[0].mxu0
  %v223 = vadd.f32 0.0, %v222
  %v224 = vpop.f32.mrb[0].mxu0
  %225 = vmatprep.mubr.bf16.mxu0 0
  %226 = vmatmul.mubr.bf16.gmra.mrb[0].mxu0 %v102
  %v227 = vpop.f32.mrb[0].mxu0
  %v228 = vadd.f32 0.0, %v227
  %v229 = vpop.f32.mrb[0].mxu0
  %v230 = vpop.f32.mrb[0].mxu0
  %v231 = vadd.f32 0.0, %v230
  %v232 = vpop.f32.mrb[0].mxu0
  %233 = vmatprep.mubr.bf16.mxu0 0
  %234 = vmatmul.mubr.bf16.gmra.mrb[0].mxu0 %v103
  %v235 = vpop.f32.mrb[0].mxu0
  %v236 = vadd.f32 0.0, %v235
  %v237 = vpop.f32.mrb[0].mxu0
  %v238 = vpop.f32.mrb[0].mxu0
  %v239 = vadd.f32 0.0, %v238
  %v240 = vpop.f32.mrb[0].mxu0
  %241 = vmatprep.mubr.bf16.mxu0 0
  %242 = vmatmul.mubr.bf16.gmra.mrb[0].mxu0 %v104
  %v243 = vpop.f32.mrb[0].mxu0
  %v244 = vadd.f32 0.0, %v243
  %v245 = vpop.f32.mrb[0].mxu0
  %v246 = vpop.f32.mrb[0].mxu0
  %v247 = vadd.f32 0.0, %v246
  %v248 = vpop.f32.mrb[0].mxu0
  %249 = vdwg.mxu0
  %v250 = vadd.f32 %v77, %v188
  %v251 = vadd.f32 %v78, %v191
  %v252 = vadd.f32 %v79, %v196
  %v253 = vadd.f32 %v80, %v199
  %v254 = vadd.f32 %v81, %v204
  %v255 = vadd.f32 %v82, %v207
  %v256 = vadd.f32 %v83, %v212
  %v257 = vadd.f32 %v84, %v215
  %v258 = vadd.f32 %v85, %v220
  %v259 = vadd.f32 %v86, %v223
  %v260 = vadd.f32 %v87, %v228
  %v261 = vadd.f32 %v88, %v231
  %v262 = vadd.f32 %v89, %v236
  %v263 = vadd.f32 %v90, %v239
  %v264 = vadd.f32 %v91, %v244
  %v265 = vadd.f32 %v92, %v247
  %266 = vst [vmem:[#allocation2] sm:$0xff] %v250
  %267 = vst [vmem:[#allocation2 + $0x8] sm:$0xff] %v251
  %268 = vst [vmem:[#allocation2 + $0x10] sm:$0xff] %v252
  %269 = vst [vmem:[#allocation2 + $0x18] sm:$0xff] %v253
  %270 = vst [vmem:[#allocation2 + $0x20] sm:$0xff] %v254
  %271 = vst [vmem:[#allocation2 + $0x28] sm:$0xff] %v255
  %272 = vst [vmem:[#allocation2 + $0x30] sm:$0xff] %v256
  %273 = vst [vmem:[#allocation2 + $0x38] sm:$0xff] %v257
  %274 = vst [vmem:[#allocation2 + $0x40] sm:$0xff] %v258
  %275 = vst [vmem:[#allocation2 + $0x48] sm:$0xff] %v259
  %276 = vst [vmem:[#allocation2 + $0x50] sm:$0xff] %v260
  %277 = vst [vmem:[#allocation2 + $0x58] sm:$0xff] %v261
  %278 = vst [vmem:[#allocation2 + $0x60] sm:$0xff] %v262
  %279 = vst [vmem:[#allocation2 + $0x68] sm:$0xff] %v263
  %280 = vst [vmem:[#allocation2 + $0x70] sm:$0xff] %v264
  %281 = vst [vmem:[#allocation2 + $0x78] sm:$0xff] %v265
  // Predicated region
  $region42: #{gcn_model_forward.3} parent=0 // pred_check
    %p282 = pneg %p31
  $region43: #{gcn_model_forward.3} parent=0 // pred_check_branch
    %284 = sbr.rel (%p282) target = $region45
  $region44: #{gcn_model_forward.3} parent=0 // pred_region
    %v285 = vld [vmem:[#allocation2] sm:$0xff]
    %v286 = vld [vmem:[#allocation2 + $0x8] sm:$0xff]
    %v287 = vld [vmem:[#allocation2 + $0x10] sm:$0xff]
    %v288 = vld [vmem:[#allocation2 + $0x18] sm:$0xff]
    %v289 = vld [vmem:[#allocation2 + $0x20] sm:$0xff]
    %v290 = vld [vmem:[#allocation2 + $0x28] sm:$0xff]
    %v291 = vld [vmem:[#allocation2 + $0x30] sm:$0xff]
    %v292 = vld [vmem:[#allocation2 + $0x38] sm:$0xff]
    %v293 = vld [vmem:[#allocation2 + $0x40] sm:$0xff]
    %v294 = vld [vmem:[#allocation2 + $0x48] sm:$0xff]
    %v295 = vld [vmem:[#allocation2 + $0x50] sm:$0xff]
    %v296 = vld [vmem:[#allocation2 + $0x58] sm:$0xff]
    %v297 = vld [vmem:[#allocation2 + $0x60] sm:$0xff]
    %v298 = vld [vmem:[#allocation2 + $0x68] sm:$0xff]
    %v299 = vld [vmem:[#allocation2 + $0x70] sm:$0xff]
    %v300 = vld [vmem:[#allocation2 + $0x78] sm:$0xff]
    %v301 = vld [vmem:[%s4] sm:$0xff]
    %v302 = vld [vmem:[%s4 + $0x8] sm:$0xff]
    %v303 = vld [vmem:[%s4 + $0x10] sm:$0xff]
    %v304 = vld [vmem:[%s4 + $0x18] sm:$0xff]
    %v305 = vld [vmem:[%s4 + $0x20] sm:$0xff]
    %v306 = vld [vmem:[%s4 + $0x28] sm:$0xff]
    %v307 = vld [vmem:[%s4 + $0x30] sm:$0xff]
    %v308 = vld [vmem:[%s4 + $0x38] sm:$0xff]
    %v309 = vld [vmem:[%s4 + $0x40] sm:$0xff]
    %v310 = vld [vmem:[%s4 + $0x48] sm:$0xff]
    %v311 = vld [vmem:[%s4 + $0x50] sm:$0xff]
    %v312 = vld [vmem:[%s4 + $0x58] sm:$0xff]
    %v313 = vld [vmem:[%s4 + $0x60] sm:$0xff]
    %v314 = vld [vmem:[%s4 + $0x68] sm:$0xff]
    %v315 = vld [vmem:[%s4 + $0x70] sm:$0xff]
    %v316 = vld [vmem:[%s4 + $0x78] sm:$0xff]
    %318 = vset.pattern.permute.xlu0 0
    %319 = vperm.xlu0 %318, %v301
    %v320 = vpop.permute.xlu0 %319
    %323 = vset.pattern.permute.xlu0 0
    %324 = vperm.xlu0 %323, %v302
    %v325 = vpop.permute.xlu0 %324
    %328 = vset.pattern.permute.xlu0 0
    %329 = vperm.xlu0 %328, %v303
    %v330 = vpop.permute.xlu0 %329
    %333 = vset.pattern.permute.xlu0 0
    %334 = vperm.xlu0 %333, %v304
    %v335 = vpop.permute.xlu0 %334
    %338 = vset.pattern.permute.xlu0 0
    %339 = vperm.xlu0 %338, %v305
    %v340 = vpop.permute.xlu0 %339
    %343 = vset.pattern.permute.xlu0 0
    %344 = vperm.xlu0 %343, %v306
    %v345 = vpop.permute.xlu0 %344
    %348 = vset.pattern.permute.xlu0 0
    %349 = vperm.xlu0 %348, %v307
    %v350 = vpop.permute.xlu0 %349
    %353 = vset.pattern.permute.xlu0 0
    %354 = vperm.xlu0 %353, %v308
    %v355 = vpop.permute.xlu0 %354
    %358 = vset.pattern.permute.xlu0 0
    %359 = vperm.xlu0 %358, %v309
    %v360 = vpop.permute.xlu0 %359
    %363 = vset.pattern.permute.xlu0 0
    %364 = vperm.xlu0 %363, %v310
    %v365 = vpop.permute.xlu0 %364
    %368 = vset.pattern.permute.xlu0 0
    %369 = vperm.xlu0 %368, %v311
    %v370 = vpop.permute.xlu0 %369
    %373 = vset.pattern.permute.xlu0 0
    %374 = vperm.xlu0 %373, %v312
    %v375 = vpop.permute.xlu0 %374
    %378 = vset.pattern.permute.xlu0 0
    %379 = vperm.xlu0 %378, %v313
    %v380 = vpop.permute.xlu0 %379
    %383 = vset.pattern.permute.xlu0 0
    %384 = vperm.xlu0 %383, %v314
    %v385 = vpop.permute.xlu0 %384
    %388 = vset.pattern.permute.xlu0 0
    %389 = vperm.xlu0 %388, %v315
    %v390 = vpop.permute.xlu0 %389
    %393 = vset.pattern.permute.xlu0 0
    %394 = vperm.xlu0 %393, %v316
    %v395 = vpop.permute.xlu0 %394
    %v397 = vmul.f32 %v285, %v320
    %v398 = vmul.f32 %v286, %v325
    %v399 = vmul.f32 %v287, %v330
    %v400 = vmul.f32 %v288, %v335
    %v401 = vmul.f32 %v289, %v340
    %v402 = vmul.f32 %v290, %v345
    %v403 = vmul.f32 %v291, %v350
    %v404 = vmul.f32 %v292, %v355
    %v405 = vmul.f32 %v293, %v360
    %v406 = vmul.f32 %v294, %v365
    %v407 = vmul.f32 %v295, %v370
    %v408 = vmul.f32 %v296, %v375
    %v409 = vmul.f32 %v297, %v380
    %v410 = vmul.f32 %v298, %v385
    %v411 = vmul.f32 %v299, %v390
    %v412 = vmul.f32 %v300, %v395
    %v413 = vpack.c.bf16 %v398, %v397
    %v414 = vpack.c.bf16 %v400, %v399
    %v415 = vpack.c.bf16 %v402, %v401
    %v416 = vpack.c.bf16 %v404, %v403
    %v417 = vpack.c.bf16 %v406, %v405
    %v418 = vpack.c.bf16 %v408, %v407
    %v419 = vpack.c.bf16 %v410, %v409
    %v420 = vpack.c.bf16 %v412, %v411
    %v421 = vld [vmem:[%s2] sm:$0xf]
    %v422 = vld [vmem:[%s2 + $0x4] sm:$0xf]
    %v423 = vld [vmem:[%s2 + $0x8] sm:$0xf]
    %v424 = vld [vmem:[%s2 + $0xc] sm:$0xf]
    %v425 = vld [vmem:[%s2 + $0x10] sm:$0xf]
    %v426 = vld [vmem:[%s2 + $0x14] sm:$0xf]
    %v427 = vld [vmem:[%s2 + $0x18] sm:$0xf]
    %v428 = vld [vmem:[%s2 + $0x1c] sm:$0xf]
    %v429 = vld [vmem:[%s2 + $0x20] sm:$0xf]
    %v430 = vld [vmem:[%s2 + $0x24] sm:$0xf]
    %v431 = vld [vmem:[%s2 + $0x28] sm:$0xf]
    %v432 = vld [vmem:[%s2 + $0x2c] sm:$0xf]
    %v433 = vld [vmem:[%s2 + $0x30] sm:$0xf]
    %v434 = vld [vmem:[%s2 + $0x34] sm:$0xf]
    %v435 = vld [vmem:[%s2 + $0x38] sm:$0xf]
    %v436 = vld [vmem:[%s2 + $0x3c] sm:$0xf]
    %v437 = vld [vmem:[%s3] sm:$0x1]
    %v439 = vlaneseq
    %v440 = vshrl.u32 %v439, 7
    %v441 = vsub.s32 0, %v440
    %v442 = vrot.slane %v437, %v441
    %v460 = vunpack.c.l.b16 %v421
    %v461 = vunpack.c.l.b16 %v422
    %v462 = vunpack.c.l.b16 %v423
    %v463 = vunpack.c.l.b16 %v424
    %v464 = vunpack.c.l.b16 %v425
    %v465 = vunpack.c.l.b16 %v426
    %v466 = vunpack.c.l.b16 %v427
    %v467 = vunpack.c.l.b16 %v428
    %v468 = vunpack.c.l.b16 %v429
    %v469 = vunpack.c.l.b16 %v430
    %v470 = vunpack.c.l.b16 %v431
    %v471 = vunpack.c.l.b16 %v432
    %v472 = vunpack.c.l.b16 %v433
    %v473 = vunpack.c.l.b16 %v434
    %v474 = vunpack.c.l.b16 %v435
    %v475 = vunpack.c.l.b16 %v436
    %v476 = vpack.c.b16 %v461, %v460
    %v477 = vpack.c.b16 %v463, %v462
    %v478 = vpack.c.b16 %v465, %v464
    %v479 = vpack.c.b16 %v467, %v466
    %v480 = vpack.c.b16 %v469, %v468
    %v481 = vpack.c.b16 %v471, %v470
    %v482 = vpack.c.b16 %v473, %v472
    %v483 = vpack.c.b16 %v475, %v474
    %492 = vmatprep.subr.bf16.mxu0 0
    %493 = vmatpush1.bf16.msra.mxu0 %v476
    %494 = vmatprep.subr.bf16.mxu0 0
    %495 = vmatpush1.bf16.msra.mxu0 %v477
    %496 = vmatprep.subr.bf16.mxu0 0
    %497 = vmatpush1.bf16.msra.mxu0 %v478
    %498 = vmatprep.subr.bf16.mxu0 0
    %499 = vmatpush1.bf16.msra.mxu0 %v479
    %500 = vmatprep.subr.bf16.mxu0 0
    %501 = vmatpush1.bf16.msra.mxu0 %v480
    %502 = vmatprep.subr.bf16.mxu0 0
    %503 = vmatpush1.bf16.msra.mxu0 %v481
    %504 = vmatprep.subr.bf16.mxu0 0
    %505 = vmatpush1.bf16.msra.mxu0 %v482
    %506 = vmatprep.subr.bf16.mxu0 0
    %507 = vmatpush1.bf16.msra.mxu0 %v483
    %508 = vmatprep.subr.bf16.mxu0 0
    %509 = vmatpush1.bf16.msra.mxu0 0
    %510 = vmatprep.subr.bf16.mxu0 0
    %511 = vmatpush1.bf16.msra.mxu0 0
    %512 = vmatprep.subr.bf16.mxu0 0
    %513 = vmatpush1.bf16.msra.mxu0 0
    %514 = vmatprep.subr.bf16.mxu0 0
    %515 = vmatpush1.bf16.msra.mxu0 0
    %516 = vmatprep.subr.bf16.mxu0 0
    %517 = vmatpush1.bf16.msra.mxu0 0
    %518 = vmatprep.subr.bf16.mxu0 0
    %519 = vmatpush1.bf16.msra.mxu0 0
    %520 = vmatprep.subr.bf16.mxu0 0
    %521 = vmatpush1.bf16.msra.mxu0 0
    %522 = vmatprep.subr.bf16.mxu0 0
    %523 = vmatpush1.bf16.msra.mxu0 0
    %524 = vmatprep.mubr.bf16.mxu0 0
    %525 = vmatmul.mubr.bf16.gmra.mrb[0].mxu0 %v413
    %v526 = vpop.f32.mrb[0].mxu0
    %v527 = vadd.f32 %v442, %v526
    %v528 = vpop.f32.mrb[0].mxu0
    %v529 = vpop.f32.mrb[0].mxu0
    %v530 = vadd.f32 %v442, %v529
    %v531 = vpop.f32.mrb[0].mxu0
    %532 = vmatprep.mubr.bf16.mxu0 0
    %533 = vmatmul.mubr.bf16.gmra.mrb[0].mxu0 %v414
    %v534 = vpop.f32.mrb[0].mxu0
    %v535 = vadd.f32 %v442, %v534
    %v536 = vpop.f32.mrb[0].mxu0
    %v537 = vpop.f32.mrb[0].mxu0
    %v538 = vadd.f32 %v442, %v537
    %v539 = vpop.f32.mrb[0].mxu0
    %540 = vmatprep.mubr.bf16.mxu0 0
    %541 = vmatmul.mubr.bf16.gmra.mrb[0].mxu0 %v415
    %v542 = vpop.f32.mrb[0].mxu0
    %v543 = vadd.f32 %v442, %v542
    %v544 = vpop.f32.mrb[0].mxu0
    %v545 = vpop.f32.mrb[0].mxu0
    %v546 = vadd.f32 %v442, %v545
    %v547 = vpop.f32.mrb[0].mxu0
    %548 = vmatprep.mubr.bf16.mxu0 0
    %549 = vmatmul.mubr.bf16.gmra.mrb[0].mxu0 %v416
    %v550 = vpop.f32.mrb[0].mxu0
    %v551 = vadd.f32 %v442, %v550
    %v552 = vpop.f32.mrb[0].mxu0
    %v553 = vpop.f32.mrb[0].mxu0
    %v554 = vadd.f32 %v442, %v553
    %v555 = vpop.f32.mrb[0].mxu0
    %556 = vmatprep.mubr.bf16.mxu0 0
    %557 = vmatmul.mubr.bf16.gmra.mrb[0].mxu0 %v417
    %v558 = vpop.f32.mrb[0].mxu0
    %v559 = vadd.f32 %v442, %v558
    %v560 = vpop.f32.mrb[0].mxu0
    %v561 = vpop.f32.mrb[0].mxu0
    %v562 = vadd.f32 %v442, %v561
    %v563 = vpop.f32.mrb[0].mxu0
    %564 = vmatprep.mubr.bf16.mxu0 0
    %565 = vmatmul.mubr.bf16.gmra.mrb[0].mxu0 %v418
    %v566 = vpop.f32.mrb[0].mxu0
    %v567 = vadd.f32 %v442, %v566
    %v568 = vpop.f32.mrb[0].mxu0
    %v569 = vpop.f32.mrb[0].mxu0
    %v570 = vadd.f32 %v442, %v569
    %v571 = vpop.f32.mrb[0].mxu0
    %572 = vmatprep.mubr.bf16.mxu0 0
    %573 = vmatmul.mubr.bf16.gmra.mrb[0].mxu0 %v419
    %v574 = vpop.f32.mrb[0].mxu0
    %v575 = vadd.f32 %v442, %v574
    %v576 = vpop.f32.mrb[0].mxu0
    %v577 = vpop.f32.mrb[0].mxu0
    %v578 = vadd.f32 %v442, %v577
    %v579 = vpop.f32.mrb[0].mxu0
    %580 = vmatprep.mubr.bf16.mxu0 0
    %581 = vmatmul.mubr.bf16.gmra.mrb[0].mxu0 %v420
    %v582 = vpop.f32.mrb[0].mxu0
    %v583 = vadd.f32 %v442, %v582
    %v584 = vpop.f32.mrb[0].mxu0
    %v585 = vpop.f32.mrb[0].mxu0
    %v586 = vadd.f32 %v442, %v585
    %v587 = vpop.f32.mrb[0].mxu0
    %588 = vdwg.mxu0
    %v589 = vmax.f32 %v527, 0.0
    %v590 = vmax.f32 %v530, 0.0
    %v591 = vmax.f32 %v535, 0.0
    %v592 = vmax.f32 %v538, 0.0
    %v593 = vmax.f32 %v543, 0.0
    %v594 = vmax.f32 %v546, 0.0
    %v595 = vmax.f32 %v551, 0.0
    %v596 = vmax.f32 %v554, 0.0
    %v597 = vmax.f32 %v559, 0.0
    %v598 = vmax.f32 %v562, 0.0
    %v599 = vmax.f32 %v567, 0.0
    %v600 = vmax.f32 %v570, 0.0
    %v601 = vmax.f32 %v575, 0.0
    %v602 = vmax.f32 %v578, 0.0
    %v603 = vmax.f32 %v583, 0.0
    %v604 = vmax.f32 %v586, 0.0
    %v605 = vld [vmem:[#allocation3] sm:$0xff]
    %v606 = vld [vmem:[%s5] sm:$0xff]
    %607 = vmatprep.subr.mxu0 0.0
    %608 = vmatpush1.msra.mxu0 %v589
    %609 = vmatprep.subr.mxu0 0.0
    %610 = vmatpush1.msra.mxu0 %v590
    %611 = vmatprep.subr.mxu0 0.0
    %612 = vmatpush1.msra.mxu0 %v591
    %613 = vmatprep.subr.mxu0 0.0
    %614 = vmatpush1.msra.mxu0 %v592
    %615 = vmatprep.subr.mxu0 0.0
    %616 = vmatpush1.msra.mxu0 %v593
    %617 = vmatprep.subr.mxu0 0.0
    %618 = vmatpush1.msra.mxu0 %v594
    %619 = vmatprep.subr.mxu0 0.0
    %620 = vmatpush1.msra.mxu0 %v595
    %621 = vmatprep.subr.mxu0 0.0
    %622 = vmatpush1.msra.mxu0 %v596
    %623 = vmatprep.subr.mxu0 0.0
    %624 = vmatpush1.msra.mxu0 %v597
    %625 = vmatprep.subr.mxu0 0.0
    %626 = vmatpush1.msra.mxu0 %v598
    %627 = vmatprep.subr.mxu0 0.0
    %628 = vmatpush1.msra.mxu0 %v599
    %629 = vmatprep.subr.mxu0 0.0
    %630 = vmatpush1.msra.mxu0 %v600
    %631 = vmatprep.subr.mxu0 0.0
    %632 = vmatpush1.msra.mxu0 %v601
    %633 = vmatprep.subr.mxu0 0.0
    %634 = vmatpush1.msra.mxu0 %v602
    %635 = vmatprep.subr.mxu0 0.0
    %636 = vmatpush1.msra.mxu0 %v603
    %637 = vmatprep.subr.mxu0 0.0
    %638 = vmatpush1.msra.mxu0 %v604
    %639 = vmatprep.subr.mxu0 0.0
    %640 = vmatpush1.msra.mxu0 0.0
    %641 = vmatprep.subr.mxu0 0.0
    %642 = vmatpush1.msra.mxu0 0.0
    %643 = vmatprep.subr.mxu0 0.0
    %644 = vmatpush1.msra.mxu0 0.0
    %645 = vmatprep.subr.mxu0 0.0
    %646 = vmatpush1.msra.mxu0 0.0
    %647 = vmatprep.subr.mxu0 0.0
    %648 = vmatpush1.msra.mxu0 0.0
    %649 = vmatprep.subr.mxu0 0.0
    %650 = vmatpush1.msra.mxu0 0.0
    %651 = vmatprep.subr.mxu0 0.0
    %652 = vmatpush1.msra.mxu0 0.0
    %653 = vmatprep.subr.mxu0 0.0
    %654 = vmatpush1.msra.mxu0 0.0
    %655 = vmatprep.subr.mxu0 0.0
    %656 = vmatpush1.msra.mxu0 0.0
    %657 = vmatprep.subr.mxu0 0.0
    %658 = vmatpush1.msra.mxu0 0.0
    %659 = vmatprep.subr.mxu0 0.0
    %660 = vmatpush1.msra.mxu0 0.0
    %661 = vmatprep.subr.mxu0 0.0
    %662 = vmatpush1.msra.mxu0 0.0
    %663 = vmatprep.subr.mxu0 0.0
    %664 = vmatpush1.msra.mxu0 0.0
    %665 = vmatprep.subr.mxu0 0.0
    %666 = vmatpush1.msra.mxu0 0.0
    %667 = vmatprep.subr.mxu0 0.0
    %668 = vmatpush1.msra.mxu0 0.0
    %669 = vmatprep.subr.mxu0 0.0
    %670 = vmatpush1.msra.mxu0 0.0
    %671 = vmatprep.mubr.f32.mxu0 0.0
    %672 = vmatmul.mubr.f32.gmra.mrb[0].mxu0 %v606
    %v673 = vpop.f32.mrb[0].mxu0
    %v674 = vadd.f32 0.0, %v673
    %v675 = vpop.f32.mrb[0].mxu0
    %676 = vdwg.mxu0
    %v677 = vadd.f32 %v605, %v674
    %678 = vst [vmem:[#allocation3] sm:$0xff] %v677
  $region45: #{gcn_model_forward.3} parent=0 // pred_fallthru
    _
  // Predicated region
  $region46: #{gcn_model_forward.3} parent=0 // pred_check
    _
  $region47: #{gcn_model_forward.3} parent=0 // pred_check_branch
    %680 = sbr.rel (%p32) target = $region49
  $region48: #{gcn_model_forward.3} parent=0 // pred_region
    %v681 = vld [vmem:[#allocation3] sm:$0xff]
    %v682 = vld [vmem:[%s6] sm:$0xff]
    %v683 = vld [vmem:[%s6 + $0x8] sm:$0xff]
    %v684 = vld [vmem:[%s6 + $0x10] sm:$0xff]
    %v685 = vld [vmem:[%s6 + $0x18] sm:$0xff]
    %v686 = vld [vmem:[%s6 + $0x20] sm:$0xff]
    %v687 = vld [vmem:[%s6 + $0x28] sm:$0xff]
    %v688 = vld [vmem:[%s6 + $0x30] sm:$0xff]
    %v689 = vld [vmem:[%s6 + $0x38] sm:$0xff]
    %v690 = vld [vmem:[%s6 + $0x40] sm:$0xff]
    %v691 = vld [vmem:[%s6 + $0x48] sm:$0xff]
    %v692 = vld [vmem:[%s6 + $0x50] sm:$0xff]
    %v693 = vld [vmem:[%s6 + $0x58] sm:$0xff]
    %v694 = vld [vmem:[%s6 + $0x60] sm:$0xff]
    %v695 = vld [vmem:[%s6 + $0x68] sm:$0xff]
    %v696 = vld [vmem:[%s6 + $0x70] sm:$0xff]
    %v697 = vld [vmem:[%s6 + $0x78] sm:$0xff]
    %v698 = vld [vmem:[%s7] sm:$0x1]
    %v700 = vlaneseq
    %v701 = vshrl.u32 %v700, 7
    %v702 = vsub.s32 0, %v701
    %v703 = vrot.slane %v698, %v702
    %705 = vmatprep.subr.mxu0 0.0
    %706 = vmatpush1.msra.mxu0 %v682
    %707 = vmatprep.subr.mxu0 0.0
    %708 = vmatpush1.msra.mxu0 %v683
    %709 = vmatprep.subr.mxu0 0.0
    %710 = vmatpush1.msra.mxu0 %v684
    %711 = vmatprep.subr.mxu0 0.0
    %712 = vmatpush1.msra.mxu0 %v685
    %713 = vmatprep.subr.mxu0 0.0
    %714 = vmatpush1.msra.mxu0 %v686
    %715 = vmatprep.subr.mxu0 0.0
    %716 = vmatpush1.msra.mxu0 %v687
    %717 = vmatprep.subr.mxu0 0.0
    %718 = vmatpush1.msra.mxu0 %v688
    %719 = vmatprep.subr.mxu0 0.0
    %720 = vmatpush1.msra.mxu0 %v689
    %721 = vmatprep.subr.mxu0 0.0
    %722 = vmatpush1.msra.mxu0 %v690
    %723 = vmatprep.subr.mxu0 0.0
    %724 = vmatpush1.msra.mxu0 %v691
    %725 = vmatprep.subr.mxu0 0.0
    %726 = vmatpush1.msra.mxu0 %v692
    %727 = vmatprep.subr.mxu0 0.0
    %728 = vmatpush1.msra.mxu0 %v693
    %729 = vmatprep.subr.mxu0 0.0
    %730 = vmatpush1.msra.mxu0 %v694
    %731 = vmatprep.subr.mxu0 0.0
    %732 = vmatpush1.msra.mxu0 %v695
    %733 = vmatprep.subr.mxu0 0.0
    %734 = vmatpush1.msra.mxu0 %v696
    %735 = vmatprep.subr.mxu0 0.0
    %736 = vmatpush1.msra.mxu0 %v697
    %737 = vmatprep.subr.mxu0 0.0
    %738 = vmatpush1.msra.mxu0 0.0
    %739 = vmatprep.subr.mxu0 0.0
    %740 = vmatpush1.msra.mxu0 0.0
    %741 = vmatprep.subr.mxu0 0.0
    %742 = vmatpush1.msra.mxu0 0.0
    %743 = vmatprep.subr.mxu0 0.0
    %744 = vmatpush1.msra.mxu0 0.0
    %745 = vmatprep.subr.mxu0 0.0
    %746 = vmatpush1.msra.mxu0 0.0
    %747 = vmatprep.subr.mxu0 0.0
    %748 = vmatpush1.msra.mxu0 0.0
    %749 = vmatprep.subr.mxu0 0.0
    %750 = vmatpush1.msra.mxu0 0.0
    %751 = vmatprep.subr.mxu0 0.0
    %752 = vmatpush1.msra.mxu0 0.0
    %753 = vmatprep.subr.mxu0 0.0
    %754 = vmatpush1.msra.mxu0 0.0
    %755 = vmatprep.subr.mxu0 0.0
    %756 = vmatpush1.msra.mxu0 0.0
    %757 = vmatprep.subr.mxu0 0.0
    %758 = vmatpush1.msra.mxu0 0.0
    %759 = vmatprep.subr.mxu0 0.0
    %760 = vmatpush1.msra.mxu0 0.0
    %761 = vmatprep.subr.mxu0 0.0
    %762 = vmatpush1.msra.mxu0 0.0
    %763 = vmatprep.subr.mxu0 0.0
    %764 = vmatpush1.msra.mxu0 0.0
    %765 = vmatprep.subr.mxu0 0.0
    %766 = vmatpush1.msra.mxu0 0.0
    %767 = vmatprep.subr.mxu0 0.0
    %768 = vmatpush1.msra.mxu0 0.0
    %769 = vmatprep.mubr.f32.mxu0 0.0
    %770 = vmatmul.mubr.f32.gmra.mrb[0].mxu0 %v681
    %v771 = vpop.f32.mrb[0].mxu0
    %v772 = vadd.f32 %v703, %v771
    %v773 = vpop.f32.mrb[0].mxu0
    %774 = vdwg.mxu0
    %775 = vst [vmem:[%s8] sm:$0xff] %v772
  $region49: #{gcn_model_forward.3} parent=0 // pred_fallthru
    _
  // Predicated region
  $region50: #{gcn_model_forward.3} parent=0 // pred_check
    _
  $region51: #{gcn_model_forward.3} parent=0 // pred_check_branch
    %777 = sbr.rel (0) target = $region53
  $region52: #{gcn_model_forward.3} parent=0 // pred_region
    _
  $region53: #{gcn_model_forward.3} parent=0 // pred_fallthru
    _
  // Predicated region
  $region54: #{gcn_model_forward.3} parent=0 // pred_check
    _
  $region55: #{gcn_model_forward.3} parent=0 // pred_check_branch
    %779 = sbr.rel (0) target = $region57
  $region56: #{gcn_model_forward.3} parent=0 // pred_region
    _
  $region57: #{gcn_model_forward.3} parent=0 // pred_fallthru
    _

// kernel: gcn_model_forward.2
$region0: #{gcn_model_forward.2}
  #allocation0 [shape = 'u32[]', space=smem, size = 0x4, offset = 0x4, fixed_abs, tag = 'smem constant byte address 0x4 - core index']
  #allocation1 [shape = 'u32[144,128]{1,0:T(1,128)}', space=vmem, size = 0x12000, scoped, tag = 'internal scratch']
  #allocation2 [shape = 'f32[128,128]{1,0:T(8,128)}', space=vmem, size = 0x10000, scoped, tag = 'scratch operand']
  %s0 = inlined_call_operand.vmem [shape: s8[128,128], index: 0, kind: input, shape index: {}]
  %s1 = inlined_call_operand.vmem [shape: bf16[128,128], index: 1, kind: input, shape index: {}]
  %s2 = inlined_call_operand.vmem [shape: bf16[128,128], index: 2, kind: input, shape index: {}]
  %s3 = inlined_call_operand.vmem [shape: f32[1,128], index: 3, kind: input, shape index: {}]
  %s4 = inlined_call_operand.vmem [shape: f32[128,1], index: 4, kind: input, shape index: {}]
  %s5 = inlined_call_operand.vmem [shape: bf16[128,128], index: 5, kind: output, shape index: {}]
  %s6 = sld [smem:[#allocation0]]
  $region38: #{gcn_model_forward.2} parent=0
    _
  %s8 = ssub.s32 1, %s6
  %s9 = scalar_select 0, %s8, %s6
  // Predicated region
  $region2: #{gcn_model_forward.2} parent=0 // pred_check
    _
  $region3: #{gcn_model_forward.2} parent=0 // pred_check_branch
    %11 = sbr.rel (0) target = $region5
  $region4: #{gcn_model_forward.2} parent=0 // pred_region
    _
  $region5: #{gcn_model_forward.2} parent=0 // pred_fallthru
    _
  // Predicated region
  $region6: #{gcn_model_forward.2} parent=0 // pred_check
    _
  $region7: #{gcn_model_forward.2} parent=0 // pred_check_branch
    %13 = sbr.rel (0) target = $region9
  $region8: #{gcn_model_forward.2} parent=0 // pred_region
    _
  $region9: #{gcn_model_forward.2} parent=0 // pred_fallthru
    _
  // Predicated region
  $region10: #{gcn_model_forward.2} parent=0 // pred_check
    _
  $region11: #{gcn_model_forward.2} parent=0 // pred_check_branch
    %15 = sbr.rel (0) target = $region13
  $region12: #{gcn_model_forward.2} parent=0 // pred_region
    _
  $region13: #{gcn_model_forward.2} parent=0 // pred_fallthru
    _
  // Predicated region
  $region14: #{gcn_model_forward.2} parent=0 // pred_check
    _
  $region15: #{gcn_model_forward.2} parent=0 // pred_check_branch
    %17 = sbr.rel (0) target = $region17
  $region16: #{gcn_model_forward.2} parent=0 // pred_region
    _
  $region17: #{gcn_model_forward.2} parent=0 // pred_fallthru
    _
  // Predicated region
  $region18: #{gcn_model_forward.2} parent=0 // pred_check
    _
  $region19: #{gcn_model_forward.2} parent=0 // pred_check_branch
    %19 = sbr.rel (0) target = $region21
  $region20: #{gcn_model_forward.2} parent=0 // pred_region
    _
  $region21: #{gcn_model_forward.2} parent=0 // pred_fallthru
    _
  %p21 = scmp.eq.s32.totalorder 0, 0
  // Predicated region
  $region22: #{gcn_model_forward.2} parent=0 // pred_check
    %p22 = pneg %p21
  $region23: #{gcn_model_forward.2} parent=0 // pred_check_branch
    %24 = sbr.rel (%p22) target = $region25
  $region24: #{gcn_model_forward.2} parent=0 // pred_region
    %25 = vst [vmem:[#allocation2] sm:$0xff] 0.0
    %26 = vst [vmem:[#allocation2 + $0x8] sm:$0xff] 0.0
    %27 = vst [vmem:[#allocation2 + $0x10] sm:$0xff] 0.0
    %28 = vst [vmem:[#allocation2 + $0x18] sm:$0xff] 0.0
    %29 = vst [vmem:[#allocation2 + $0x20] sm:$0xff] 0.0
    %30 = vst [vmem:[#allocation2 + $0x28] sm:$0xff] 0.0
    %31 = vst [vmem:[#allocation2 + $0x30] sm:$0xff] 0.0
    %32 = vst [vmem:[#allocation2 + $0x38] sm:$0xff] 0.0
    %33 = vst [vmem:[#allocation2 + $0x40] sm:$0xff] 0.0
    %34 = vst [vmem:[#allocation2 + $0x48] sm:$0xff] 0.0
    %35 = vst [vmem:[#allocation2 + $0x50] sm:$0xff] 0.0
    %36 = vst [vmem:[#allocation2 + $0x58] sm:$0xff] 0.0
    %37 = vst [vmem:[#allocation2 + $0x60] sm:$0xff] 0.0
    %38 = vst [vmem:[#allocation2 + $0x68] sm:$0xff] 0.0
    %39 = vst [vmem:[#allocation2 + $0x70] sm:$0xff] 0.0
    %40 = vst [vmem:[#allocation2 + $0x78] sm:$0xff] 0.0
  $region25: #{gcn_model_forward.2} parent=0 // pred_fallthru
    _
  %s41 = smul.u32 0, 128
  %s42 = sshra.s32 %s41, 3
  %s43 = sand.u32 %s41, 7
  %s44 = smul.addr %s42, 4
  %s45 = scalar_lea.vmem %s1, %s44
  %v46 = vld [vmem:[%s45] sm:$0xf]
  %v47 = vld [vmem:[%s45 + $0x4] sm:$0xf]
  %v48 = vld [vmem:[%s45 + $0x8] sm:$0xf]
  %v49 = vld [vmem:[%s45 + $0xc] sm:$0xf]
  %v50 = vld [vmem:[%s45 + $0x10] sm:$0xf]
  %v51 = vld [vmem:[%s45 + $0x14] sm:$0xf]
  %v52 = vld [vmem:[%s45 + $0x18] sm:$0xf]
  %v53 = vld [vmem:[%s45 + $0x1c] sm:$0xf]
  %v54 = vld [vmem:[%s45 + $0x20] sm:$0xf]
  %v55 = vld [vmem:[%s45 + $0x24] sm:$0xf]
  %v56 = vld [vmem:[%s45 + $0x28] sm:$0xf]
  %v57 = vld [vmem:[%s45 + $0x2c] sm:$0xf]
  %v58 = vld [vmem:[%s45 + $0x30] sm:$0xf]
  %v59 = vld [vmem:[%s45 + $0x34] sm:$0xf]
  %v60 = vld [vmem:[%s45 + $0x38] sm:$0xf]
  %v61 = vld [vmem:[%s45 + $0x3c] sm:$0xf]
  %v62 = vld [vmem:[#allocation2] sm:$0xff]
  %v63 = vld [vmem:[#allocation2 + $0x8] sm:$0xff]
  %v64 = vld [vmem:[#allocation2 + $0x10] sm:$0xff]
  %v65 = vld [vmem:[#allocation2 + $0x18] sm:$0xff]
  %v66 = vld [vmem:[#allocation2 + $0x20] sm:$0xff]
  %v67 = vld [vmem:[#allocation2 + $0x28] sm:$0xff]
  %v68 = vld [vmem:[#allocation2 + $0x30] sm:$0xff]
  %v69 = vld [vmem:[#allocation2 + $0x38] sm:$0xff]
  %v70 = vld [vmem:[#allocation2 + $0x40] sm:$0xff]
  %v71 = vld [vmem:[#allocation2 + $0x48] sm:$0xff]
  %v72 = vld [vmem:[#allocation2 + $0x50] sm:$0xff]
  %v73 = vld [vmem:[#allocation2 + $0x58] sm:$0xff]
  %v74 = vld [vmem:[#allocation2 + $0x60] sm:$0xff]
  %v75 = vld [vmem:[#allocation2 + $0x68] sm:$0xff]
  %v76 = vld [vmem:[#allocation2 + $0x70] sm:$0xff]
  %v77 = vld [vmem:[#allocation2 + $0x78] sm:$0xff]
  %v78 = vld [vmem:[%s0] sm:$0xff]
  %v79 = vld [vmem:[%s0 + $0x8] sm:$0xff]
  %v80 = vld [vmem:[%s0 + $0x10] sm:$0xff]
  %v81 = vld [vmem:[%s0 + $0x18] sm:$0xff]
  %v82 = vunpack.c.l.s8.bf16 %v78
  %v83 = vunpack.c.h.s8.bf16 %v78
  %v84 = vunpack.c.l.s8.bf16 %v79
  %v85 = vunpack.c.h.s8.bf16 %v79
  %v86 = vunpack.c.l.s8.bf16 %v80
  %v87 = vunpack.c.h.s8.bf16 %v80
  %v88 = vunpack.c.l.s8.bf16 %v81
  %v89 = vunpack.c.h.s8.bf16 %v81
  %v106 = vunpack.c.l.b16 %v46
  %v107 = vunpack.c.l.b16 %v47
  %v108 = vunpack.c.l.b16 %v48
  %v109 = vunpack.c.l.b16 %v49
  %v110 = vunpack.c.l.b16 %v50
  %v111 = vunpack.c.l.b16 %v51
  %v112 = vunpack.c.l.b16 %v52
  %v113 = vunpack.c.l.b16 %v53
  %v114 = vunpack.c.l.b16 %v54
  %v115 = vunpack.c.l.b16 %v55
  %v116 = vunpack.c.l.b16 %v56
  %v117 = vunpack.c.l.b16 %v57
  %v118 = vunpack.c.l.b16 %v58
  %v119 = vunpack.c.l.b16 %v59
  %v120 = vunpack.c.l.b16 %v60
  %v121 = vunpack.c.l.b16 %v61
  %v122 = vpack.c.b16 %v107, %v106
  %v123 = vpack.c.b16 %v109, %v108
  %v124 = vpack.c.b16 %v111, %v110
  %v125 = vpack.c.b16 %v113, %v112
  %v126 = vpack.c.b16 %v115, %v114
  %v127 = vpack.c.b16 %v117, %v116
  %v128 = vpack.c.b16 %v119, %v118
  %v129 = vpack.c.b16 %v121, %v120
  %138 = vmatprep.subr.bf16.mxu0 0
  %139 = vmatpush1.bf16.msra.mxu0 %v122
  %140 = vmatprep.subr.bf16.mxu0 0
  %141 = vmatpush1.bf16.msra.mxu0 %v123
  %142 = vmatprep.subr.bf16.mxu0 0
  %143 = vmatpush1.bf16.msra.mxu0 %v124
  %144 = vmatprep.subr.bf16.mxu0 0
  %145 = vmatpush1.bf16.msra.mxu0 %v125
  %146 = vmatprep.subr.bf16.mxu0 0
  %147 = vmatpush1.bf16.msra.mxu0 %v126
  %148 = vmatprep.subr.bf16.mxu0 0
  %149 = vmatpush1.bf16.msra.mxu0 %v127
  %150 = vmatprep.subr.bf16.mxu0 0
  %151 = vmatpush1.bf16.msra.mxu0 %v128
  %152 = vmatprep.subr.bf16.mxu0 0
  %153 = vmatpush1.bf16.msra.mxu0 %v129
  %154 = vmatprep.subr.bf16.mxu0 0
  %155 = vmatpush1.bf16.msra.mxu0 0
  %156 = vmatprep.subr.bf16.mxu0 0
  %157 = vmatpush1.bf16.msra.mxu0 0
  %158 = vmatprep.subr.bf16.mxu0 0
  %159 = vmatpush1.bf16.msra.mxu0 0
  %160 = vmatprep.subr.bf16.mxu0 0
  %161 = vmatpush1.bf16.msra.mxu0 0
  %162 = vmatprep.subr.bf16.mxu0 0
  %163 = vmatpush1.bf16.msra.mxu0 0
  %164 = vmatprep.subr.bf16.mxu0 0
  %165 = vmatpush1.bf16.msra.mxu0 0
  %166 = vmatprep.subr.bf16.mxu0 0
  %167 = vmatpush1.bf16.msra.mxu0 0
  %168 = vmatprep.subr.bf16.mxu0 0
  %169 = vmatpush1.bf16.msra.mxu0 0
  %170 = vmatprep.mubr.bf16.mxu0 0
  %171 = vmatmul.mubr.bf16.gmra.mrb[0].mxu0 %v82
  %v172 = vpop.f32.mrb[0].mxu0
  %v173 = vadd.f32 0.0, %v172
  %v174 = vpop.f32.mrb[0].mxu0
  %v175 = vpop.f32.mrb[0].mxu0
  %v176 = vadd.f32 0.0, %v175
  %v177 = vpop.f32.mrb[0].mxu0
  %178 = vmatprep.mubr.bf16.mxu0 0
  %179 = vmatmul.mubr.bf16.gmra.mrb[0].mxu0 %v83
  %v180 = vpop.f32.mrb[0].mxu0
  %v181 = vadd.f32 0.0, %v180
  %v182 = vpop.f32.mrb[0].mxu0
  %v183 = vpop.f32.mrb[0].mxu0
  %v184 = vadd.f32 0.0, %v183
  %v185 = vpop.f32.mrb[0].mxu0
  %186 = vmatprep.mubr.bf16.mxu0 0
  %187 = vmatmul.mubr.bf16.gmra.mrb[0].mxu0 %v84
  %v188 = vpop.f32.mrb[0].mxu0
  %v189 = vadd.f32 0.0, %v188
  %v190 = vpop.f32.mrb[0].mxu0
  %v191 = vpop.f32.mrb[0].mxu0
  %v192 = vadd.f32 0.0, %v191
  %v193 = vpop.f32.mrb[0].mxu0
  %194 = vmatprep.mubr.bf16.mxu0 0
  %195 = vmatmul.mubr.bf16.gmra.mrb[0].mxu0 %v85
  %v196 = vpop.f32.mrb[0].mxu0
  %v197 = vadd.f32 0.0, %v196
  %v198 = vpop.f32.mrb[0].mxu0
  %v199 = vpop.f32.mrb[0].mxu0
  %v200 = vadd.f32 0.0, %v199
  %v201 = vpop.f32.mrb[0].mxu0
  %202 = vmatprep.mubr.bf16.mxu0 0
  %203 = vmatmul.mubr.bf16.gmra.mrb[0].mxu0 %v86
  %v204 = vpop.f32.mrb[0].mxu0
  %v205 = vadd.f32 0.0, %v204
  %v206 = vpop.f32.mrb[0].mxu0
  %v207 = vpop.f32.mrb[0].mxu0
  %v208 = vadd.f32 0.0, %v207
  %v209 = vpop.f32.mrb[0].mxu0
  %210 = vmatprep.mubr.bf16.mxu0 0
  %211 = vmatmul.mubr.bf16.gmra.mrb[0].mxu0 %v87
  %v212 = vpop.f32.mrb[0].mxu0
  %v213 = vadd.f32 0.0, %v212
  %v214 = vpop.f32.mrb[0].mxu0
  %v215 = vpop.f32.mrb[0].mxu0
  %v216 = vadd.f32 0.0, %v215
  %v217 = vpop.f32.mrb[0].mxu0
  %218 = vmatprep.mubr.bf16.mxu0 0
  %219 = vmatmul.mubr.bf16.gmra.mrb[0].mxu0 %v88
  %v220 = vpop.f32.mrb[0].mxu0
  %v221 = vadd.f32 0.0, %v220
  %v222 = vpop.f32.mrb[0].mxu0
  %v223 = vpop.f32.mrb[0].mxu0
  %v224 = vadd.f32 0.0, %v223
  %v225 = vpop.f32.mrb[0].mxu0
  %226 = vmatprep.mubr.bf16.mxu0 0
  %227 = vmatmul.mubr.bf16.gmra.mrb[0].mxu0 %v89
  %v228 = vpop.f32.mrb[0].mxu0
  %v229 = vadd.f32 0.0, %v228
  %v230 = vpop.f32.mrb[0].mxu0
  %v231 = vpop.f32.mrb[0].mxu0
  %v232 = vadd.f32 0.0, %v231
  %v233 = vpop.f32.mrb[0].mxu0
  %234 = vdwg.mxu0
  %v235 = vadd.f32 %v62, %v173
  %v236 = vadd.f32 %v63, %v176
  %v237 = vadd.f32 %v64, %v181
  %v238 = vadd.f32 %v65, %v184
  %v239 = vadd.f32 %v66, %v189
  %v240 = vadd.f32 %v67, %v192
  %v241 = vadd.f32 %v68, %v197
  %v242 = vadd.f32 %v69, %v200
  %v243 = vadd.f32 %v70, %v205
  %v244 = vadd.f32 %v71, %v208
  %v245 = vadd.f32 %v72, %v213
  %v246 = vadd.f32 %v73, %v216
  %v247 = vadd.f32 %v74, %v221
  %v248 = vadd.f32 %v75, %v224
  %v249 = vadd.f32 %v76, %v229
  %v250 = vadd.f32 %v77, %v232
  %251 = vst [vmem:[#allocation2] sm:$0xff] %v235
  %252 = vst [vmem:[#allocation2 + $0x8] sm:$0xff] %v236
  %253 = vst [vmem:[#allocation2 + $0x10] sm:$0xff] %v237
  %254 = vst [vmem:[#allocation2 + $0x18] sm:$0xff] %v238
  %255 = vst [vmem:[#allocation2 + $0x20] sm:$0xff] %v239
  %256 = vst [vmem:[#allocation2 + $0x28] sm:$0xff] %v240
  %257 = vst [vmem:[#allocation2 + $0x30] sm:$0xff] %v241
  %258 = vst [vmem:[#allocation2 + $0x38] sm:$0xff] %v242
  %259 = vst [vmem:[#allocation2 + $0x40] sm:$0xff] %v243
  %260 = vst [vmem:[#allocation2 + $0x48] sm:$0xff] %v244
  %261 = vst [vmem:[#allocation2 + $0x50] sm:$0xff] %v245
  %262 = vst [vmem:[#allocation2 + $0x58] sm:$0xff] %v246
  %263 = vst [vmem:[#allocation2 + $0x60] sm:$0xff] %v247
  %264 = vst [vmem:[#allocation2 + $0x68] sm:$0xff] %v248
  %265 = vst [vmem:[#allocation2 + $0x70] sm:$0xff] %v249
  %266 = vst [vmem:[#allocation2 + $0x78] sm:$0xff] %v250
  // Predicated region
  $region26: #{gcn_model_forward.2} parent=0 // pred_check
    %p267 = pneg %p21
  $region27: #{gcn_model_forward.2} parent=0 // pred_check_branch
    %269 = sbr.rel (%p267) target = $region29
  $region28: #{gcn_model_forward.2} parent=0 // pred_region
    %v270 = vld [vmem:[#allocation2] sm:$0xff]
    %v271 = vld [vmem:[#allocation2 + $0x8] sm:$0xff]
    %v272 = vld [vmem:[#allocation2 + $0x10] sm:$0xff]
    %v273 = vld [vmem:[#allocation2 + $0x18] sm:$0xff]
    %v274 = vld [vmem:[#allocation2 + $0x20] sm:$0xff]
    %v275 = vld [vmem:[#allocation2 + $0x28] sm:$0xff]
    %v276 = vld [vmem:[#allocation2 + $0x30] sm:$0xff]
    %v277 = vld [vmem:[#allocation2 + $0x38] sm:$0xff]
    %v278 = vld [vmem:[#allocation2 + $0x40] sm:$0xff]
    %v279 = vld [vmem:[#allocation2 + $0x48] sm:$0xff]
    %v280 = vld [vmem:[#allocation2 + $0x50] sm:$0xff]
    %v281 = vld [vmem:[#allocation2 + $0x58] sm:$0xff]
    %v282 = vld [vmem:[#allocation2 + $0x60] sm:$0xff]
    %v283 = vld [vmem:[#allocation2 + $0x68] sm:$0xff]
    %v284 = vld [vmem:[#allocation2 + $0x70] sm:$0xff]
    %v285 = vld [vmem:[#allocation2 + $0x78] sm:$0xff]
    %v286 = vld [vmem:[%s4] sm:$0xff]
    %v287 = vld [vmem:[%s4 + $0x8] sm:$0xff]
    %v288 = vld [vmem:[%s4 + $0x10] sm:$0xff]
    %v289 = vld [vmem:[%s4 + $0x18] sm:$0xff]
    %v290 = vld [vmem:[%s4 + $0x20] sm:$0xff]
    %v291 = vld [vmem:[%s4 + $0x28] sm:$0xff]
    %v292 = vld [vmem:[%s4 + $0x30] sm:$0xff]
    %v293 = vld [vmem:[%s4 + $0x38] sm:$0xff]
    %v294 = vld [vmem:[%s4 + $0x40] sm:$0xff]
    %v295 = vld [vmem:[%s4 + $0x48] sm:$0xff]
    %v296 = vld [vmem:[%s4 + $0x50] sm:$0xff]
    %v297 = vld [vmem:[%s4 + $0x58] sm:$0xff]
    %v298 = vld [vmem:[%s4 + $0x60] sm:$0xff]
    %v299 = vld [vmem:[%s4 + $0x68] sm:$0xff]
    %v300 = vld [vmem:[%s4 + $0x70] sm:$0xff]
    %v301 = vld [vmem:[%s4 + $0x78] sm:$0xff]
    %303 = vset.pattern.permute.xlu0 0
    %304 = vperm.xlu0 %303, %v286
    %v305 = vpop.permute.xlu0 %304
    %308 = vset.pattern.permute.xlu0 0
    %309 = vperm.xlu0 %308, %v287
    %v310 = vpop.permute.xlu0 %309
    %313 = vset.pattern.permute.xlu0 0
    %314 = vperm.xlu0 %313, %v288
    %v315 = vpop.permute.xlu0 %314
    %318 = vset.pattern.permute.xlu0 0
    %319 = vperm.xlu0 %318, %v289
    %v320 = vpop.permute.xlu0 %319
    %323 = vset.pattern.permute.xlu0 0
    %324 = vperm.xlu0 %323, %v290
    %v325 = vpop.permute.xlu0 %324
    %328 = vset.pattern.permute.xlu0 0
    %329 = vperm.xlu0 %328, %v291
    %v330 = vpop.permute.xlu0 %329
    %333 = vset.pattern.permute.xlu0 0
    %334 = vperm.xlu0 %333, %v292
    %v335 = vpop.permute.xlu0 %334
    %338 = vset.pattern.permute.xlu0 0
    %339 = vperm.xlu0 %338, %v293
    %v340 = vpop.permute.xlu0 %339
    %343 = vset.pattern.permute.xlu0 0
    %344 = vperm.xlu0 %343, %v294
    %v345 = vpop.permute.xlu0 %344
    %348 = vset.pattern.permute.xlu0 0
    %349 = vperm.xlu0 %348, %v295
    %v350 = vpop.permute.xlu0 %349
    %353 = vset.pattern.permute.xlu0 0
    %354 = vperm.xlu0 %353, %v296
    %v355 = vpop.permute.xlu0 %354
    %358 = vset.pattern.permute.xlu0 0
    %359 = vperm.xlu0 %358, %v297
    %v360 = vpop.permute.xlu0 %359
    %363 = vset.pattern.permute.xlu0 0
    %364 = vperm.xlu0 %363, %v298
    %v365 = vpop.permute.xlu0 %364
    %368 = vset.pattern.permute.xlu0 0
    %369 = vperm.xlu0 %368, %v299
    %v370 = vpop.permute.xlu0 %369
    %373 = vset.pattern.permute.xlu0 0
    %374 = vperm.xlu0 %373, %v300
    %v375 = vpop.permute.xlu0 %374
    %378 = vset.pattern.permute.xlu0 0
    %379 = vperm.xlu0 %378, %v301
    %v380 = vpop.permute.xlu0 %379
    %v382 = vmul.f32 %v270, %v305
    %v383 = vmul.f32 %v271, %v310
    %v384 = vmul.f32 %v272, %v315
    %v385 = vmul.f32 %v273, %v320
    %v386 = vmul.f32 %v274, %v325
    %v387 = vmul.f32 %v275, %v330
    %v388 = vmul.f32 %v276, %v335
    %v389 = vmul.f32 %v277, %v340
    %v390 = vmul.f32 %v278, %v345
    %v391 = vmul.f32 %v279, %v350
    %v392 = vmul.f32 %v280, %v355
    %v393 = vmul.f32 %v281, %v360
    %v394 = vmul.f32 %v282, %v365
    %v395 = vmul.f32 %v283, %v370
    %v396 = vmul.f32 %v284, %v375
    %v397 = vmul.f32 %v285, %v380
    %v398 = vpack.c.bf16 %v383, %v382
    %v399 = vpack.c.bf16 %v385, %v384
    %v400 = vpack.c.bf16 %v387, %v386
    %v401 = vpack.c.bf16 %v389, %v388
    %v402 = vpack.c.bf16 %v391, %v390
    %v403 = vpack.c.bf16 %v393, %v392
    %v404 = vpack.c.bf16 %v395, %v394
    %v405 = vpack.c.bf16 %v397, %v396
    %v406 = vld [vmem:[%s2] sm:$0xf]
    %v407 = vld [vmem:[%s2 + $0x4] sm:$0xf]
    %v408 = vld [vmem:[%s2 + $0x8] sm:$0xf]
    %v409 = vld [vmem:[%s2 + $0xc] sm:$0xf]
    %v410 = vld [vmem:[%s2 + $0x10] sm:$0xf]
    %v411 = vld [vmem:[%s2 + $0x14] sm:$0xf]
    %v412 = vld [vmem:[%s2 + $0x18] sm:$0xf]
    %v413 = vld [vmem:[%s2 + $0x1c] sm:$0xf]
    %v414 = vld [vmem:[%s2 + $0x20] sm:$0xf]
    %v415 = vld [vmem:[%s2 + $0x24] sm:$0xf]
    %v416 = vld [vmem:[%s2 + $0x28] sm:$0xf]
    %v417 = vld [vmem:[%s2 + $0x2c] sm:$0xf]
    %v418 = vld [vmem:[%s2 + $0x30] sm:$0xf]
    %v419 = vld [vmem:[%s2 + $0x34] sm:$0xf]
    %v420 = vld [vmem:[%s2 + $0x38] sm:$0xf]
    %v421 = vld [vmem:[%s2 + $0x3c] sm:$0xf]
    %v422 = vld [vmem:[%s3] sm:$0x1]
    %v424 = vlaneseq
    %v425 = vshrl.u32 %v424, 7
    %v426 = vsub.s32 0, %v425
    %v427 = vrot.slane %v422, %v426
    %v445 = vunpack.c.l.b16 %v406
    %v446 = vunpack.c.l.b16 %v407
    %v447 = vunpack.c.l.b16 %v408
    %v448 = vunpack.c.l.b16 %v409
    %v449 = vunpack.c.l.b16 %v410
    %v450 = vunpack.c.l.b16 %v411
    %v451 = vunpack.c.l.b16 %v412
    %v452 = vunpack.c.l.b16 %v413
    %v453 = vunpack.c.l.b16 %v414
    %v454 = vunpack.c.l.b16 %v415
    %v455 = vunpack.c.l.b16 %v416
    %v456 = vunpack.c.l.b16 %v417
    %v457 = vunpack.c.l.b16 %v418
    %v458 = vunpack.c.l.b16 %v419
    %v459 = vunpack.c.l.b16 %v420
    %v460 = vunpack.c.l.b16 %v421
    %v461 = vpack.c.b16 %v446, %v445
    %v462 = vpack.c.b16 %v448, %v447
    %v463 = vpack.c.b16 %v450, %v449
    %v464 = vpack.c.b16 %v452, %v451
    %v465 = vpack.c.b16 %v454, %v453
    %v466 = vpack.c.b16 %v456, %v455
    %v467 = vpack.c.b16 %v458, %v457
    %v468 = vpack.c.b16 %v460, %v459
    %477 = vmatprep.subr.bf16.mxu0 0
    %478 = vmatpush1.bf16.msra.mxu0 %v461
    %479 = vmatprep.subr.bf16.mxu0 0
    %480 = vmatpush1.bf16.msra.mxu0 %v462
    %481 = vmatprep.subr.bf16.mxu0 0
    %482 = vmatpush1.bf16.msra.mxu0 %v463
    %483 = vmatprep.subr.bf16.mxu0 0
    %484 = vmatpush1.bf16.msra.mxu0 %v464
    %485 = vmatprep.subr.bf16.mxu0 0
    %486 = vmatpush1.bf16.msra.mxu0 %v465
    %487 = vmatprep.subr.bf16.mxu0 0
    %488 = vmatpush1.bf16.msra.mxu0 %v466
    %489 = vmatprep.subr.bf16.mxu0 0
    %490 = vmatpush1.bf16.msra.mxu0 %v467
    %491 = vmatprep.subr.bf16.mxu0 0
    %492 = vmatpush1.bf16.msra.mxu0 %v468
    %493 = vmatprep.subr.bf16.mxu0 0
    %494 = vmatpush1.bf16.msra.mxu0 0
    %495 = vmatprep.subr.bf16.mxu0 0
    %496 = vmatpush1.bf16.msra.mxu0 0
    %497 = vmatprep.subr.bf16.mxu0 0
    %498 = vmatpush1.bf16.msra.mxu0 0
    %499 = vmatprep.subr.bf16.mxu0 0
    %500 = vmatpush1.bf16.msra.mxu0 0
    %501 = vmatprep.subr.bf16.mxu0 0
    %502 = vmatpush1.bf16.msra.mxu0 0
    %503 = vmatprep.subr.bf16.mxu0 0
    %504 = vmatpush1.bf16.msra.mxu0 0
    %505 = vmatprep.subr.bf16.mxu0 0
    %506 = vmatpush1.bf16.msra.mxu0 0
    %507 = vmatprep.subr.bf16.mxu0 0
    %508 = vmatpush1.bf16.msra.mxu0 0
    %509 = vmatprep.mubr.bf16.mxu0 0
    %510 = vmatmul.mubr.bf16.gmra.mrb[0].mxu0 %v398
    %v511 = vpop.f32.mrb[0].mxu0
    %v512 = vadd.f32 %v427, %v511
    %v513 = vpop.f32.mrb[0].mxu0
    %v514 = vpop.f32.mrb[0].mxu0
    %v515 = vadd.f32 %v427, %v514
    %v516 = vpop.f32.mrb[0].mxu0
    %517 = vmatprep.mubr.bf16.mxu0 0
    %518 = vmatmul.mubr.bf16.gmra.mrb[0].mxu0 %v399
    %v519 = vpop.f32.mrb[0].mxu0
    %v520 = vadd.f32 %v427, %v519
    %v521 = vpop.f32.mrb[0].mxu0
    %v522 = vpop.f32.mrb[0].mxu0
    %v523 = vadd.f32 %v427, %v522
    %v524 = vpop.f32.mrb[0].mxu0
    %525 = vmatprep.mubr.bf16.mxu0 0
    %526 = vmatmul.mubr.bf16.gmra.mrb[0].mxu0 %v400
    %v527 = vpop.f32.mrb[0].mxu0
    %v528 = vadd.f32 %v427, %v527
    %v529 = vpop.f32.mrb[0].mxu0
    %v530 = vpop.f32.mrb[0].mxu0
    %v531 = vadd.f32 %v427, %v530
    %v532 = vpop.f32.mrb[0].mxu0
    %533 = vmatprep.mubr.bf16.mxu0 0
    %534 = vmatmul.mubr.bf16.gmra.mrb[0].mxu0 %v401
    %v535 = vpop.f32.mrb[0].mxu0
    %v536 = vadd.f32 %v427, %v535
    %v537 = vpop.f32.mrb[0].mxu0
    %v538 = vpop.f32.mrb[0].mxu0
    %v539 = vadd.f32 %v427, %v538
    %v540 = vpop.f32.mrb[0].mxu0
    %541 = vmatprep.mubr.bf16.mxu0 0
    %542 = vmatmul.mubr.bf16.gmra.mrb[0].mxu0 %v402
    %v543 = vpop.f32.mrb[0].mxu0
    %v544 = vadd.f32 %v427, %v543
    %v545 = vpop.f32.mrb[0].mxu0
    %v546 = vpop.f32.mrb[0].mxu0
    %v547 = vadd.f32 %v427, %v546
    %v548 = vpop.f32.mrb[0].mxu0
    %549 = vmatprep.mubr.bf16.mxu0 0
    %550 = vmatmul.mubr.bf16.gmra.mrb[0].mxu0 %v403
    %v551 = vpop.f32.mrb[0].mxu0
    %v552 = vadd.f32 %v427, %v551
    %v553 = vpop.f32.mrb[0].mxu0
    %v554 = vpop.f32.mrb[0].mxu0
    %v555 = vadd.f32 %v427, %v554
    %v556 = vpop.f32.mrb[0].mxu0
    %557 = vmatprep.mubr.bf16.mxu0 0
    %558 = vmatmul.mubr.bf16.gmra.mrb[0].mxu0 %v404
    %v559 = vpop.f32.mrb[0].mxu0
    %v560 = vadd.f32 %v427, %v559
    %v561 = vpop.f32.mrb[0].mxu0
    %v562 = vpop.f32.mrb[0].mxu0
    %v563 = vadd.f32 %v427, %v562
    %v564 = vpop.f32.mrb[0].mxu0
    %565 = vmatprep.mubr.bf16.mxu0 0
    %566 = vmatmul.mubr.bf16.gmra.mrb[0].mxu0 %v405
    %v567 = vpop.f32.mrb[0].mxu0
    %v568 = vadd.f32 %v427, %v567
    %v569 = vpop.f32.mrb[0].mxu0
    %v570 = vpop.f32.mrb[0].mxu0
    %v571 = vadd.f32 %v427, %v570
    %v572 = vpop.f32.mrb[0].mxu0
    %573 = vdwg.mxu0
    %v574 = vmax.f32 %v512, 0.0
    %v575 = vmax.f32 %v515, 0.0
    %v576 = vmax.f32 %v520, 0.0
    %v577 = vmax.f32 %v523, 0.0
    %v578 = vmax.f32 %v528, 0.0
    %v579 = vmax.f32 %v531, 0.0
    %v580 = vmax.f32 %v536, 0.0
    %v581 = vmax.f32 %v539, 0.0
    %v582 = vmax.f32 %v544, 0.0
    %v583 = vmax.f32 %v547, 0.0
    %v584 = vmax.f32 %v552, 0.0
    %v585 = vmax.f32 %v555, 0.0
    %v586 = vmax.f32 %v560, 0.0
    %v587 = vmax.f32 %v563, 0.0
    %v588 = vmax.f32 %v568, 0.0
    %v589 = vmax.f32 %v571, 0.0
    %v590 = vmul.f32 %v574, %v305
    %v591 = vmul.f32 %v575, %v310
    %v592 = vmul.f32 %v576, %v315
    %v593 = vmul.f32 %v577, %v320
    %v594 = vmul.f32 %v578, %v325
    %v595 = vmul.f32 %v579, %v330
    %v596 = vmul.f32 %v580, %v335
    %v597 = vmul.f32 %v581, %v340
    %v598 = vmul.f32 %v582, %v345
    %v599 = vmul.f32 %v583, %v350
    %v600 = vmul.f32 %v584, %v355
    %v601 = vmul.f32 %v585, %v360
    %v602 = vmul.f32 %v586, %v365
    %v603 = vmul.f32 %v587, %v370
    %v604 = vmul.f32 %v588, %v375
    %v605 = vmul.f32 %v589, %v380
    %v606 = vpack.c.bf16 %v591, %v590
    %v607 = vpack.c.bf16 %v593, %v592
    %v608 = vpack.c.bf16 %v595, %v594
    %v609 = vpack.c.bf16 %v597, %v596
    %v610 = vpack.c.bf16 %v599, %v598
    %v611 = vpack.c.bf16 %v601, %v600
    %v612 = vpack.c.bf16 %v603, %v602
    %v613 = vpack.c.bf16 %v605, %v604
    %v622 = vunpack.c.l.b16 %v606
    %v623 = vunpack.c.h.b16 %v606
    %v624 = vunpack.c.l.b16 %v607
    %v625 = vunpack.c.h.b16 %v607
    %v626 = vunpack.c.l.b16 %v608
    %v627 = vunpack.c.h.b16 %v608
    %v628 = vunpack.c.l.b16 %v609
    %v629 = vunpack.c.h.b16 %v609
    %v630 = vunpack.c.l.b16 %v610
    %v631 = vunpack.c.h.b16 %v610
    %v632 = vunpack.c.l.b16 %v611
    %v633 = vunpack.c.h.b16 %v611
    %v634 = vunpack.c.l.b16 %v612
    %v635 = vunpack.c.h.b16 %v612
    %v636 = vunpack.c.l.b16 %v613
    %v637 = vunpack.c.h.b16 %v613
    %v638 = vpack.c.b16 %v622, %v622
    %v639 = vpack.c.b16 %v623, %v623
    %v640 = vpack.c.b16 %v624, %v624
    %v641 = vpack.c.b16 %v625, %v625
    %v642 = vpack.c.b16 %v626, %v626
    %v643 = vpack.c.b16 %v627, %v627
    %v644 = vpack.c.b16 %v628, %v628
    %v645 = vpack.c.b16 %v629, %v629
    %v646 = vpack.c.b16 %v630, %v630
    %v647 = vpack.c.b16 %v631, %v631
    %v648 = vpack.c.b16 %v632, %v632
    %v649 = vpack.c.b16 %v633, %v633
    %v650 = vpack.c.b16 %v634, %v634
    %v651 = vpack.c.b16 %v635, %v635
    %v652 = vpack.c.b16 %v636, %v636
    %v653 = vpack.c.b16 %v637, %v637
    %670 = vst [vmem:[%s5] sm:$0xf] %v638
    %671 = vst [vmem:[%s5 + $0x4] sm:$0xf] %v639
    %672 = vst [vmem:[%s5 + $0x8] sm:$0xf] %v640
    %673 = vst [vmem:[%s5 + $0xc] sm:$0xf] %v641
    %674 = vst [vmem:[%s5 + $0x10] sm:$0xf] %v642
    %675 = vst [vmem:[%s5 + $0x14] sm:$0xf] %v643
    %676 = vst [vmem:[%s5 + $0x18] sm:$0xf] %v644
    %677 = vst [vmem:[%s5 + $0x1c] sm:$0xf] %v645
    %678 = vst [vmem:[%s5 + $0x20] sm:$0xf] %v646
    %679 = vst [vmem:[%s5 + $0x24] sm:$0xf] %v647
    %680 = vst [vmem:[%s5 + $0x28] sm:$0xf] %v648
    %681 = vst [vmem:[%s5 + $0x2c] sm:$0xf] %v649
    %682 = vst [vmem:[%s5 + $0x30] sm:$0xf] %v650
    %683 = vst [vmem:[%s5 + $0x34] sm:$0xf] %v651
    %684 = vst [vmem:[%s5 + $0x38] sm:$0xf] %v652
    %685 = vst [vmem:[%s5 + $0x3c] sm:$0xf] %v653
  $region29: #{gcn_model_forward.2} parent=0 // pred_fallthru
    _
  // Predicated region
  $region30: #{gcn_model_forward.2} parent=0 // pred_check
    _
  $region31: #{gcn_model_forward.2} parent=0 // pred_check_branch
    %687 = sbr.rel (0) target = $region33
  $region32: #{gcn_model_forward.2} parent=0 // pred_region
    _
  $region33: #{gcn_model_forward.2} parent=0 // pred_fallthru
    _
  // Predicated region
  $region34: #{gcn_model_forward.2} parent=0 // pred_check
    _
  $region35: #{gcn_model_forward.2} parent=0 // pred_check_branch
    %689 = sbr.rel (0) target = $region37
  $region36: #{gcn_model_forward.2} parent=0 // pred_region
    _
  $region37: #{gcn_model_forward.2} parent=0 // pred_fallthru
    _

</llo_original>
